<compile_context>
chip_gen: v5e
topology: v5e:2x2
jax: 0.10.0
libtpu: 0.0.40
codegen_flags: <defaults>
</compile_context>

<pallas_src>
import jax
import jax.numpy as jnp
from jax import lax
from jax.experimental import pallas as pl
from jax.experimental.pallas import tpu as pltpu


_VMEM_LIMIT_BYTES = 32 * 1024 * 1024   # safe scoped limit on v5e/v6e/v7x


def _round_up(x, m):
    return ((x + m - 1) // m) * m


# ----------------------------- Pallas matmul kernels -----------------------------

def _mm_nn_acc_kernel(a_ref, b_ref, o_ref, acc_ref):
    # C = A @ B, K-tiled (grid axis 2 is the reduction axis).
    @pl.when(pl.program_id(2) == 0)
    def _():
        acc_ref[...] = jnp.zeros_like(acc_ref)

    acc_ref[...] += jnp.dot(a_ref[...], b_ref[...],
                            preferred_element_type=jnp.float32)

    @pl.when(pl.program_id(2) == pl.num_programs(2) - 1)
    def _():
        o_ref[...] = acc_ref[...].astype(o_ref.dtype)


def _mm_nn_simple_kernel(a_ref, b_ref, o_ref):
    # Single K block: write straight to the output, no scratch accumulator.
    o_ref[...] = jnp.dot(a_ref[...], b_ref[...],
                         preferred_element_type=jnp.float32).astype(o_ref.dtype)


_TN_DIMS = (((0,), (0,)), ((), ()))   # contract dim 0 of both: A^T @ B


def _mm_tn_acc_kernel(a_ref, b_ref, o_ref, acc_ref):
    # C = A^T @ B with A read un-transposed ((tk, tm) blocks).
    @pl.when(pl.program_id(2) == 0)
    def _():
        acc_ref[...] = jnp.zeros_like(acc_ref)

    acc_ref[...] += lax.dot_general(a_ref[...], b_ref[...], _TN_DIMS,
                                    preferred_element_type=jnp.float32)

    @pl.when(pl.program_id(2) == pl.num_programs(2) - 1)
    def _():
        o_ref[...] = acc_ref[...].astype(o_ref.dtype)


def _mm_tn_simple_kernel(a_ref, b_ref, o_ref):
    o_ref[...] = lax.dot_general(a_ref[...], b_ref[...], _TN_DIMS,
                                 preferred_element_type=jnp.float32
                                 ).astype(o_ref.dtype)


def _pallas_matmul(a, b, out_dtype, *, tm, tn, tk, transpose_lhs):
    """transpose_lhs=False: C[M,N] = A[M,K] @ B[K,N]
       transpose_lhs=True : C[M,N] = A[K,M]^T @ B[K,N]  (A read as stored)."""
    if transpose_lhs:
        K, M = a.shape
        a_spec = pl.BlockSpec((tk, tm), lambda i, j, k: (k, i))
        kern_acc, kern_simple = _mm_tn_acc_kernel, _mm_tn_simple_kernel
    else:
        M, K = a.shape
        a_spec = pl.BlockSpec((tm, tk), lambda i, j, k: (i, k))
        kern_acc, kern_simple = _mm_nn_acc_kernel, _mm_nn_simple_kernel
    K2, N = b.shape
    assert K == K2
    assert M % tm == 0 and N % tn == 0 and K % tk == 0
    nk = K // tk

    in_specs = [a_spec, pl.BlockSpec((tk, tn), lambda i, j, k: (k, j))]
    out_specs = pl.BlockSpec((tm, tn), lambda i, j, k: (i, j))
    scratch = [] if nk == 1 else [pltpu.VMEM((tm, tn), jnp.float32)]
    kernel = kern_simple if nk == 1 else kern_acc

    return pl.pallas_call(
        kernel,
        out_shape=jax.ShapeDtypeStruct((M, N), out_dtype),
        grid_spec=pltpu.PrefetchScalarGridSpec(
            num_scalar_prefetch=0,
            grid=(M // tm, N // tn, nk),
            in_specs=in_specs,
            out_specs=out_specs,
            scratch_shapes=scratch,
        ),
        compiler_params=pltpu.CompilerParams(
            dimension_semantics=("parallel", "parallel", "arbitrary"),
            vmem_limit_bytes=_VMEM_LIMIT_BYTES,
        ),
    )(a, b)


# ----------------------------- UserSpotConv wrapper -----------------------------

class UserSpotConvPallas:
    """JAX/Pallas port of UserSpotConv.  `user_spot` is int32 [2, n_edges]."""

    TILE_ROW = 512   # user / spot row-dim tile (also the reduction tile)

    def __init__(self, user_spot, n_user, m_spot):
        self.n_user = n_user
        self.m_spot = m_spot
        self.u_pad = _round_up(n_user, self.TILE_ROW)
        self.s_pad = _round_up(m_spot, self.TILE_ROW)

        u_idx = user_spot[0]
        s_idx = user_spot[1]
        # Degrees (counts per index), like torch.unique(..., return_counts=True).
        user_div = jnp.zeros((n_user,), jnp.float32).at[u_idx].add(1.0)
        spot_div = jnp.zeros((m_spot,), jnp.float32).at[s_idx].add(1.0)
        div = jnp.sqrt(user_div[u_idx] * spot_div[s_idx])           # (n_edges,)

        # Dense symmetric-normalized adjacency, built (in f32) directly into the
        # tile-padded shape, then stored in bf16 (the HBM-dominant operand).
        adj = jnp.zeros((self.u_pad, self.s_pad), jnp.float32).at[
            u_idx, s_idx].add(1.0 / div)
        self.adj = adj.astype(jnp.bfloat16)

    def __call__(self, spot_x, user_x):
        n_user, m_spot = self.n_user, self.m_spot
        D = spot_x.shape[1]
        d_pad = _round_up(D, 128)                       # lane-dense feature dim
        tn = 256 if d_pad % 256 == 0 else 128
        out_dtype = spot_x.dtype
        t = self.TILE_ROW

        spot_xp = jnp.pad(spot_x.astype(jnp.bfloat16),
                          ((0, self.s_pad - m_spot), (0, d_pad - D)))
        user_xp = jnp.pad(user_x.astype(jnp.bfloat16),
                          ((0, self.u_pad - n_user), (0, d_pad - D)))

        # user_out = A @ spot_x
        user_out = _pallas_matmul(self.adj, spot_xp, out_dtype,
                                  tm=t, tn=tn, tk=t, transpose_lhs=False)
        # spot_out = A^T @ user_x   (A read as stored; no adj.T materialized)
        spot_out = _pallas_matmul(self.adj, user_xp, out_dtype,
                                  tm=t, tn=tn, tk=t, transpose_lhs=True)

        return spot_out[:m_spot, :D], user_out[:n_user, :D]


# ----------------------------- pure-JAX reference -----------------------------

def reference(user_spot, spot_x, user_x, n_user, m_spot):
    u_idx, s_idx = user_spot[0], user_spot[1]
    user_div = jnp.zeros((n_user,), jnp.float32).at[u_idx].add(1.0)
    spot_div = jnp.zeros((m_spot,), jnp.float32).at[s_idx].add(1.0)
    div = jnp.sqrt(user_div[u_idx] * spot_div[s_idx])[:, None]
    src_spot = spot_x[s_idx] / div
    user_out = jnp.zeros_like(user_x).at[u_idx].add(src_spot)
    src_user = user_x[u_idx] / div
    spot_out = jnp.zeros_like(spot_x).at[s_idx].add(src_user)
    return spot_out, user_out


# ----------------------------- main -----------------------------

if __name__ == "__main__":
    # Small synthetic sizes consistent with the module (user/spot embedding
    # tables).  Chosen so both kernel variants are exercised:
    #   user_out matmul: K grid extent 2 (accumulator path),
    #   spot_out matmul: M grid extent 2, K extent 1 (simple path).
    n_user, m_spot, D, n_edges = 300, 600, 64, 4096

    key = jax.random.PRNGKey(0)
    k1, k2, k3, k4 = jax.random.split(key, 4)
    u_idx = jax.random.randint(k1, (n_edges,), 0, n_user, dtype=jnp.int32)
    s_idx = jax.random.randint(k2, (n_edges,), 0, m_spot, dtype=jnp.int32)
    user_spot = jnp.stack([u_idx, s_idx], axis=0)            # [2, n_edges]

    spot_x = jax.random.normal(k3, (m_spot, D), jnp.float32)
    user_x = jax.random.normal(k4, (n_user, D), jnp.float32)

    conv = UserSpotConvPallas(user_spot, n_user, m_spot)
    spot_out, user_out = conv(spot_x, user_x)
    jax.block_until_ready((spot_out, user_out))

    spot_ref, user_ref = reference(user_spot, spot_x, user_x, n_user, m_spot)
    assert spot_out.shape == spot_ref.shape and user_out.shape == user_ref.shape
    # bf16 adjacency/operands -> ~1e-3 relative rounding per edge; loosen tol.
    assert jnp.allclose(spot_out, spot_ref, atol=2e-2, rtol=2e-2)
    assert jnp.allclose(user_out, user_ref, atol=2e-2, rtol=2e-2)

    print("KERNEL_OK")
</pallas_src>

<mosaic_0001>
module attributes {stable_mosaic.version = 11 : i64} {
  func.func @_mm_nn_acc_kernel(%arg0: i32, %arg1: i32, %arg2: i32, %arg3: memref<512x512xbf16, #tpu.memory_space<vmem>>, %arg4: memref<512x128xbf16, #tpu.memory_space<vmem>>, %arg5: memref<512x128xf32, #tpu.memory_space<vmem>>, %arg6: memref<512x128xf32, #tpu.memory_space<vmem>>) attributes {dimension_semantics = [#tpu.dimension_semantics<parallel>, #tpu.dimension_semantics<parallel>, #tpu.dimension_semantics<arbitrary>], iteration_bounds = array<i64: 1, 1, 2>, scalar_prefetch = 0 : i64, scratch_operands = 1 : i64, tpu.core_type = #tpu.core_type<tc>, window_params = [{transform_indices = @transform_0, window_bounds = array<i64: 512, 512>}, {transform_indices = @transform_1, window_bounds = array<i64: 512, 128>}, {transform_indices = @transform_2, window_bounds = array<i64: 512, 128>}]} {
    %c0_i32 = arith.constant 0 : i32
    %0 = arith.cmpi eq, %arg2, %c0_i32 : i32
    %1 = arith.extui %0 : i1 to i32
    %c0_i32_0 = arith.constant 0 : i32
    %2 = arith.cmpi ne, %1, %c0_i32_0 : i32
    scf.if %2 {
      %cst_9 = arith.constant 0.000000e+00 : f32
      %12 = vector.broadcast %cst_9 : f32 to vector<512x128xf32>
      %c0_10 = arith.constant 0 : index
      %c0_11 = arith.constant 0 : index
      %13 = vector.load %arg6[%c0_10, %c0_11] : memref<512x128xf32, #tpu.memory_space<vmem>>, vector<512x128xf32>
      tpu.vector_store %arg6[%c0_10, %c0_11], %12 {strides = array<i32>} : memref<512x128xf32, #tpu.memory_space<vmem>>, vector<512x128xf32>,
    } else {
    }
    %c0 = arith.constant 0 : index
    %c0_1 = arith.constant 0 : index
    %3 = vector.load %arg6[%c0, %c0_1] : memref<512x128xf32, #tpu.memory_space<vmem>>, vector<512x128xf32>
    %c0_2 = arith.constant 0 : index
    %c0_3 = arith.constant 0 : index
    %4 = vector.load %arg3[%c0_2, %c0_3] : memref<512x512xbf16, #tpu.memory_space<vmem>>, vector<512x512xbf16>
    %c0_4 = arith.constant 0 : index
    %c0_5 = arith.constant 0 : index
    %5 = vector.load %arg4[%c0_4, %c0_5] : memref<512x128xbf16, #tpu.memory_space<vmem>>, vector<512x128xbf16>
    %cst = arith.constant dense<0.000000e+00> : vector<512x128xf32>
    %6 = tpu.matmul %4, %5, %cst {dimension_numbers = #tpu.dot_dimension_numbers<[1], [0], [0], [1], [0, 0, 1, 1], [], []>} : vector<512x512xbf16>, vector<512x128xbf16>, vector<512x128xf32> -> vector<512x128xf32>
    %7 = arith.addf %3, %6 : vector<512x128xf32>
    %c0_6 = arith.constant 0 : index
    %c0_7 = arith.constant 0 : index
    %8 = vector.load %arg6[%c0_6, %c0_7] : memref<512x128xf32, #tpu.memory_space<vmem>>, vector<512x128xf32>
    tpu.vector_store %arg6[%c0_6, %c0_7], %7 {strides = array<i32>} : memref<512x128xf32, #tpu.memory_space<vmem>>, vector<512x128xf32>,
    %c1_i32 = arith.constant 1 : i32
    %9 = arith.cmpi eq, %arg2, %c1_i32 : i32
    %10 = arith.extui %9 : i1 to i32
    %c0_i32_8 = arith.constant 0 : i32
    %11 = arith.cmpi ne, %10, %c0_i32_8 : i32
    scf.if %11 {
      %c0_9 = arith.constant 0 : index
      %c0_10 = arith.constant 0 : index
      %12 = vector.load %arg6[%c0_9, %c0_10] : memref<512x128xf32, #tpu.memory_space<vmem>>, vector<512x128xf32>
      %c0_11 = arith.constant 0 : index
      %c0_12 = arith.constant 0 : index
      %13 = vector.load %arg5[%c0_11, %c0_12] : memref<512x128xf32, #tpu.memory_space<vmem>>, vector<512x128xf32>
      tpu.vector_store %arg5[%c0_11, %c0_12], %12 {strides = array<i32>} : memref<512x128xf32, #tpu.memory_space<vmem>>, vector<512x128xf32>,
    } else {
    }
    return
  }
  func.func @transform_0(%arg0: i32, %arg1: i32, %arg2: i32) -> (i32, i32) {
    %c0_i32 = arith.constant 0 : i32
    return %arg0, %arg2 : i32, i32
  }
  func.func @transform_1(%arg0: i32, %arg1: i32, %arg2: i32) -> (i32, i32) {
    %c0_i32 = arith.constant 0 : i32
    return %arg2, %arg1 : i32, i32
  }
  func.func @transform_2(%arg0: i32, %arg1: i32, %arg2: i32) -> (i32, i32) {
    %c0_i32 = arith.constant 0 : i32
    return %arg0, %arg1 : i32, i32
  }
}

</mosaic_0001>

<llo_original>
// kernel: tpu_custom_call.1
$region0: #{tpu_custom_call.1}
  #allocation0 [shape = 'u32[]', space=smem, size = 0x4, offset = 0x4, fixed_abs, tag = 'smem constant byte address 0x4 - core index']
  #allocation1 [shape = 'u32[72,128]{1,0:T(1,128)}', space=vmem, size = 0x9000, scoped, tag = 'internal scratch']
  #allocation2 [shape = 'f32[512,128]{1,0:T(8,128)}', space=vmem, size = 0x40000, scoped, tag = 'scratch operand']
  %s0 = inlined_call_operand.hbm [shape: bf16[512,1024], index: 0, kind: input, shape index: {}]
  %s1 = inlined_call_operand.hbm [shape: bf16[1024,128], index: 1, kind: input, shape index: {}]
  %s2 = inlined_call_operand.hbm [shape: f32[512,128], index: 2, kind: output, shape index: {}]
  %s3 = sld [smem:[#allocation0]]
  $region57: #{tpu_custom_call.1} parent=0
    _
  %s5 = ssub.s32 1, %s3
  %s6 = scalar_select 0, %s5, %s3
  $region1: #{tpu_custom_call.1} parent=0
    #allocation3 [shape = 'u8[1048576]{0}', space=vmem, size = 0x100000, scoped, tag = 'input window, operand 0']
    #allocation4 [shape = 's32[2]{0}', space=sflag, size = 0x8, scoped, tag = 'scoped memory for tpu_custom_call.1']
    #allocation5 [shape = 's32[2]{0}', space=sflag, size = 0x8, scoped, tag = 'scoped memory for tpu_custom_call.1']
    #allocation6 [shape = 'u8[262144]{0}', space=vmem, size = 0x40000, scoped, tag = 'input window, operand 1']
    #allocation7 [shape = 's32[2]{0}', space=sflag, size = 0x8, scoped, tag = 'scoped memory for tpu_custom_call.1']
    #allocation8 [shape = 'u8[262144]{0}', space=vmem, size = 0x40000, scoped, tag = 'output window, operand 0, single buffered']
    %7 = vsyncpa [#allocation4], 0
    %s8 = scalar_lea.sflag [#allocation4], 1
    %9 = vsyncpa %s8, 0
    %10 = vsyncpa [#allocation7], 0
    %s11 = scalar_lea.sflag [#allocation7], 1
    %12 = vsyncpa %s11, 0
    %13 = vsyncpa [#allocation5], 0
    loop: start=0, step=1, limit=4
    $region2: #{tpu_custom_call.1} parent=1 // loop_pre_header
      _
    $region3: #{tpu_custom_call.1} parent=1 // loop_header
      %s15 = sphi 0, %s19
      %p16 = scmp.ge.s32.totalorder %s15, 4
      %s22 = sphi 0, %s41
      %s23 = sphi 0, %s37
      %s24 = sphi 0, %s33
      %s25 = sphi 0, %s22
      %s26 = sphi 0, %s23
      %s27 = sphi 0, %s24
      %s28 = sphi 0, %s25
      %s29 = sphi 0, %s26
      %s30 = sphi 0, %s27
      %s46 = sphi 0, %s48
      %s49 = sphi 0, %s46
      %s50 = sphi 0, %s49
      %s66 = sphi 0, %s50
      %s74 = sphi 0, %s76
      %s77 = sphi 0, %s74
      %s78 = sphi 0, %s77
      %s94 = sphi 0, %s78
      %s102 = sphi 0, %s104
      %s105 = sphi 0, %s102
      %s106 = sphi 0, %s105
      %s122 = sphi 0, %s106
    $region4: #{tpu_custom_call.1} parent=1 // loop_header_branch
      %18 = sbr.rel (%p16) target = $region8
    $region5: #{tpu_custom_call.1} parent=1 // loop_body
      %s20 = ssub.s32 %s15, 1
      %s21 = ssub.s32 %s15, 2
      %s31 = sadd.s32 1, %s24
      %p32 = scmp.ge.s32.totalorder %s31, 2
      %s33 = scalar_select %p32, 0, %s31
      %s34 = sadd.s32 1, %s23
      %s35 = scalar_select %p32, %s34, %s23
      %p36 = scmp.ge.s32.totalorder %s35, 1
      %s37 = scalar_select %p36, 0, %s35
      %s38 = sadd.s32 1, %s22
      %s39 = scalar_select %p36, %s38, %s22
      %p40 = scmp.ge.s32.totalorder %s39, 1
      %s41 = scalar_select %p40, 0, %s39
      %s42 = ssub.s32 %s22, %s41
      %s43 = ssub.s32 %s24, %s33
      %s44 = sor.u32 %s42, %s43
      %p45 = scmp.eq.s32.totalorder %s44, 0
      %s47 = sadd.s32 %s46, 1
      %s48 = scalar_select %p45, %s46, %s47
      %p51 = pneg %p45
      %p52 = scmp.eq.s32.totalorder %s15, 1
      %p53 = por %p51, %p52
      %p54 = scmp.ne.s32.totalorder %s46, %s49
      %p55 = scmp.eq.s32.totalorder %s15, 0
      %p56 = por %p54, %p55
      %p57 = scmp.ne.s32.totalorder %s46, %s49
      %p58 = scmp.eq.s32.totalorder %s20, 1
      %p59 = por %p57, %p58
      %p60 = scmp.ne.s32.totalorder %s49, %s50
      %p61 = scmp.eq.s32.totalorder %s20, 0
      %p62 = por %p60, %p61
      %p63 = scmp.ne.s32.totalorder %s49, %s50
      %p64 = scmp.eq.s32.totalorder %s21, 1
      %p65 = por %p63, %p64
      %p67 = scmp.ne.s32.totalorder %s50, %s66
      %p68 = scmp.eq.s32.totalorder %s21, 0
      %p69 = por %p67, %p68
      %s70 = ssub.s32 %s24, %s33
      %s71 = ssub.s32 %s23, %s37
      %s72 = sor.u32 %s70, %s71
      %p73 = scmp.eq.s32.totalorder %s72, 0
      %s75 = sadd.s32 %s74, 1
      %s76 = scalar_select %p73, %s74, %s75
      %p79 = pneg %p73
      %p80 = scmp.eq.s32.totalorder %s15, 1
      %p81 = por %p79, %p80
      %p82 = scmp.ne.s32.totalorder %s74, %s77
      %p83 = scmp.eq.s32.totalorder %s15, 0
      %p84 = por %p82, %p83
      %p85 = scmp.ne.s32.totalorder %s74, %s77
      %p86 = scmp.eq.s32.totalorder %s20, 1
      %p87 = por %p85, %p86
      %p88 = scmp.ne.s32.totalorder %s77, %s78
      %p89 = scmp.eq.s32.totalorder %s20, 0
      %p90 = por %p88, %p89
      %p91 = scmp.ne.s32.totalorder %s77, %s78
      %p92 = scmp.eq.s32.totalorder %s21, 1
      %p93 = por %p91, %p92
      %p95 = scmp.ne.s32.totalorder %s78, %s94
      %p96 = scmp.eq.s32.totalorder %s21, 0
      %p97 = por %p95, %p96
      %s98 = ssub.s32 %s22, %s41
      %s99 = ssub.s32 %s23, %s37
      %s100 = sor.u32 %s98, %s99
      %p101 = scmp.eq.s32.totalorder %s100, 0
      %s103 = sadd.s32 %s102, 1
      %s104 = scalar_select %p101, %s102, %s103
      %p107 = pneg %p101
      %p108 = scmp.eq.s32.totalorder %s15, 1
      %p109 = por %p107, %p108
      %p110 = scmp.ne.s32.totalorder %s102, %s105
      %p111 = scmp.eq.s32.totalorder %s15, 0
      %p112 = por %p110, %p111
      %p113 = scmp.ne.s32.totalorder %s102, %s105
      %p114 = scmp.eq.s32.totalorder %s20, 1
      %p115 = por %p113, %p114
      %p116 = scmp.ne.s32.totalorder %s105, %s106
      %p117 = scmp.eq.s32.totalorder %s20, 0
      %p118 = por %p116, %p117
      %p119 = scmp.ne.s32.totalorder %s105, %s106
      %p120 = scmp.eq.s32.totalorder %s21, 1
      %p121 = por %p119, %p120
      %p123 = scmp.ne.s32.totalorder %s106, %s122
      %p124 = scmp.eq.s32.totalorder %s21, 0
      %p125 = por %p123, %p124
      %p126 = scmp.le.s32.totalorder 1, %s15
      %p127 = scmp.lt.s32.totalorder %s15, 3
      %p128 = pnand %p126, %p127
      %p129 = pneg %p128
      // Predicated region
      $region9: #{tpu_custom_call.1} parent=5 // pred_check
        _
      $region10: #{tpu_custom_call.1} parent=5 // pred_check_branch
        %131 = sbr.rel (%p128) target = $region12
      $region11: #{tpu_custom_call.1} parent=5 // pred_region
        %s132 = ssub.s32 %s15, 1
      $region12: #{tpu_custom_call.1} parent=5 // pred_fallthru
        _
      %p133 = scmp.lt.s32.totalorder %s15, 2
      // Predicated region
      $region13: #{tpu_custom_call.1} parent=5 // pred_check
        %p134 = pneg %p133
      $region14: #{tpu_custom_call.1} parent=5 // pred_check_branch
        %136 = sbr.rel (%p134) target = $region16
      $region15: #{tpu_custom_call.1} parent=5 // pred_region
        // Predicated region
        $region17: #{tpu_custom_call.1} parent=15 // pred_check
          %p137 = pneg %p56
        $region18: #{tpu_custom_call.1} parent=15 // pred_check_branch
          %139 = sbr.rel (%p137) target = $region20
        $region19: #{tpu_custom_call.1} parent=15 // pred_region
          %s140 = sand.u32 %s46, 1
          %s141 = scalar_lea.sflag [#allocation4], %s140
          %s142 = sand.u32 %s46, 1
          %s143 = smul.addr %s142, 1024
          %s144 = scalar_lea.vmem [#allocation3], %s143
          %s145 = smul.u32 64, %s22
          %s146 = smul.u32 4, %s24
          %148 = vsyncadd %s141, 0
          %s149 = smul.addr %s145, 8
          %s150 = sadd.s32 %s146, %s149
          %s151 = smul.addr %s150, 4
          %s152 = scalar_lea.hbm %s0, %s151
          %s153 = sshll.u32 %s152, 4
          %s154 = int_to_ptr.hbm [resolvable:$true] %s153
          %s155 = sshll.u32 %s144, 4
          %s156 = int_to_ptr.vmem [resolvable:$true] %s155
          %161 = dma.hbm_to_vmem [thread:$0]  %s154, 16384, %s156, %s141, 512, 256, 16
        $region20: #{tpu_custom_call.1} parent=15 // pred_fallthru
          _
        // Predicated region
        $region21: #{tpu_custom_call.1} parent=15 // pred_check
          %p162 = pneg %p84
        $region22: #{tpu_custom_call.1} parent=15 // pred_check_branch
          %164 = sbr.rel (%p162) target = $region24
        $region23: #{tpu_custom_call.1} parent=15 // pred_region
          %s165 = sand.u32 %s74, 1
          %s166 = scalar_lea.sflag [#allocation7], %s165
          %s167 = sand.u32 %s74, 1
          %s168 = smul.addr %s167, 256
          %s169 = scalar_lea.vmem [#allocation6], %s168
          %s170 = smul.u32 64, %s24
          %172 = vsyncadd %s166, 0
          %s173 = sadd.s32 %s23, %s170
          %s174 = smul.addr %s173, 4
          %s175 = scalar_lea.hbm %s1, %s174
          %s176 = sshll.u32 %s175, 4
          %s177 = int_to_ptr.hbm [resolvable:$true] %s176
          %s178 = sshll.u32 %s169, 4
          %s179 = int_to_ptr.vmem [resolvable:$true] %s178
          %184 = dma.hbm_to_vmem [thread:$0]  %s177, 4096, %s179, %s166, 64, 64, 4
        $region24: #{tpu_custom_call.1} parent=15 // pred_fallthru
          _
      $region16: #{tpu_custom_call.1} parent=5 // pred_fallthru
        _
      %p185 = scmp.le.s32.totalorder 1, %s15
      %p186 = scmp.lt.s32.totalorder %s15, 3
      %p187 = pnand %p185, %p186
      %p188 = pneg %p187
      // Predicated region
      $region25: #{tpu_custom_call.1} parent=5 // pred_check
        _
      $region26: #{tpu_custom_call.1} parent=5 // pred_check_branch
        %190 = sbr.rel (%p187) target = $region28
      $region27: #{tpu_custom_call.1} parent=5 // pred_region
        %s191 = ssub.s32 %s15, 1
        %s192 = sand.u32 %s49, 1
        %s193 = scalar_lea.sflag [#allocation4], %s192
        %s194 = sand.u32 %s49, 1
        %s195 = smul.addr %s194, 1024
        %s196 = scalar_lea.vmem [#allocation3], %s195
        // Predicated region
        $region29: #{tpu_custom_call.1} parent=27 // pred_check
          %p197 = pneg %p62
        $region30: #{tpu_custom_call.1} parent=27 // pred_check_branch
          %199 = sbr.rel (%p197) target = $region32
        $region31: #{tpu_custom_call.1} parent=27 // pred_region
          %201 = dma.done %s193, 16384
        $region32: #{tpu_custom_call.1} parent=27 // pred_fallthru
          _
        %s202 = sand.u32 %s77, 1
        %s203 = scalar_lea.sflag [#allocation7], %s202
        %s204 = sand.u32 %s77, 1
        %s205 = smul.addr %s204, 256
        %s206 = scalar_lea.vmem [#allocation6], %s205
        // Predicated region
        $region33: #{tpu_custom_call.1} parent=27 // pred_check
          %p207 = pneg %p90
        $region34: #{tpu_custom_call.1} parent=27 // pred_check_branch
          %209 = sbr.rel (%p207) target = $region36
        $region35: #{tpu_custom_call.1} parent=27 // pred_region
          %211 = dma.done %s203, 4096
        $region36: #{tpu_custom_call.1} parent=27 // pred_fallthru
          _
        %s212 = sand.u32 %s49, 1
        %s213 = scalar_lea.sflag [#allocation4], %s212
        %s214 = sand.u32 %s49, 1
        %s215 = smul.addr %s214, 1024
        %s216 = scalar_lea.vmem [#allocation3], %s215
        %p217 = pneg %p62
        %p218 = pneg %p59
        %s219 = sand.u32 %s77, 1
        %s220 = scalar_lea.sflag [#allocation7], %s219
        %s221 = sand.u32 %s77, 1
        %s222 = smul.addr %s221, 256
        %s223 = scalar_lea.vmem [#allocation6], %s222
        %p224 = pneg %p90
        %p225 = pneg %p87
        %p226 = pneg %p118
        %p227 = pneg %p115
        %s228 = smul.u32 64, %s25
        %s229 = smul.u32 4, %s27
        %s230 = smul.u32 64, %s27
        %s231 = smul.u32 64, %s25
        %p232 = scmp.eq.s32.totalorder %s27, 0
        // Predicated region
        $region37: #{tpu_custom_call.1} parent=27 // pred_check
          %p233 = pneg %p232
        $region38: #{tpu_custom_call.1} parent=27 // pred_check_branch
          %235 = sbr.rel (%p233) target = $region40
        $region39: #{tpu_custom_call.1} parent=27 // pred_region
          %236 = vst [vmem:[#allocation2] sm:$0xff] 0.0
          %237 = vst [vmem:[#allocation2 + $0x8] sm:$0xff] 0.0
          %238 = vst [vmem:[#allocation2 + $0x10] sm:$0xff] 0.0
          %239 = vst [vmem:[#allocation2 + $0x18] sm:$0xff] 0.0
          %240 = vst [vmem:[#allocation2 + $0x20] sm:$0xff] 0.0
          %241 = vst [vmem:[#allocation2 + $0x28] sm:$0xff] 0.0
          %242 = vst [vmem:[#allocation2 + $0x30] sm:$0xff] 0.0
          %243 = vst [vmem:[#allocation2 + $0x38] sm:$0xff] 0.0
          %244 = vst [vmem:[#allocation2 + $0x40] sm:$0xff] 0.0
          %245 = vst [vmem:[#allocation2 + $0x48] sm:$0xff] 0.0
          %246 = vst [vmem:[#allocation2 + $0x50] sm:$0xff] 0.0
          %247 = vst [vmem:[#allocation2 + $0x58] sm:$0xff] 0.0
          %248 = vst [vmem:[#allocation2 + $0x60] sm:$0xff] 0.0
          %249 = vst [vmem:[#allocation2 + $0x68] sm:$0xff] 0.0
          %250 = vst [vmem:[#allocation2 + $0x70] sm:$0xff] 0.0
          %251 = vst [vmem:[#allocation2 + $0x78] sm:$0xff] 0.0
          %252 = vst [vmem:[#allocation2 + $0x80] sm:$0xff] 0.0
          %253 = vst [vmem:[#allocation2 + $0x88] sm:$0xff] 0.0
          %254 = vst [vmem:[#allocation2 + $0x90] sm:$0xff] 0.0
          %255 = vst [vmem:[#allocation2 + $0x98] sm:$0xff] 0.0
          %256 = vst [vmem:[#allocation2 + $0xa0] sm:$0xff] 0.0
          %257 = vst [vmem:[#allocation2 + $0xa8] sm:$0xff] 0.0
          %258 = vst [vmem:[#allocation2 + $0xb0] sm:$0xff] 0.0
          %259 = vst [vmem:[#allocation2 + $0xb8] sm:$0xff] 0.0
          %260 = vst [vmem:[#allocation2 + $0xc0] sm:$0xff] 0.0
          %261 = vst [vmem:[#allocation2 + $0xc8] sm:$0xff] 0.0
          %262 = vst [vmem:[#allocation2 + $0xd0] sm:$0xff] 0.0
          %263 = vst [vmem:[#allocation2 + $0xd8] sm:$0xff] 0.0
          %264 = vst [vmem:[#allocation2 + $0xe0] sm:$0xff] 0.0
          %265 = vst [vmem:[#allocation2 + $0xe8] sm:$0xff] 0.0
          %266 = vst [vmem:[#allocation2 + $0xf0] sm:$0xff] 0.0
          %267 = vst [vmem:[#allocation2 + $0xf8] sm:$0xff] 0.0
          %268 = vst [vmem:[#allocation2 + $0x100] sm:$0xff] 0.0
          %269 = vst [vmem:[#allocation2 + $0x108] sm:$0xff] 0.0
          %270 = vst [vmem:[#allocation2 + $0x110] sm:$0xff] 0.0
          %271 = vst [vmem:[#allocation2 + $0x118] sm:$0xff] 0.0
          %272 = vst [vmem:[#allocation2 + $0x120] sm:$0xff] 0.0
          %273 = vst [vmem:[#allocation2 + $0x128] sm:$0xff] 0.0
          %274 = vst [vmem:[#allocation2 + $0x130] sm:$0xff] 0.0
          %275 = vst [vmem:[#allocation2 + $0x138] sm:$0xff] 0.0
          %276 = vst [vmem:[#allocation2 + $0x140] sm:$0xff] 0.0
          %277 = vst [vmem:[#allocation2 + $0x148] sm:$0xff] 0.0
          %278 = vst [vmem:[#allocation2 + $0x150] sm:$0xff] 0.0
          %279 = vst [vmem:[#allocation2 + $0x158] sm:$0xff] 0.0
          %280 = vst [vmem:[#allocation2 + $0x160] sm:$0xff] 0.0
          %281 = vst [vmem:[#allocation2 + $0x168] sm:$0xff] 0.0
          %282 = vst [vmem:[#allocation2 + $0x170] sm:$0xff] 0.0
          %283 = vst [vmem:[#allocation2 + $0x178] sm:$0xff] 0.0
          %284 = vst [vmem:[#allocation2 + $0x180] sm:$0xff] 0.0
          %285 = vst [vmem:[#allocation2 + $0x188] sm:$0xff] 0.0
          %286 = vst [vmem:[#allocation2 + $0x190] sm:$0xff] 0.0
          %287 = vst [vmem:[#allocation2 + $0x198] sm:$0xff] 0.0
          %288 = vst [vmem:[#allocation2 + $0x1a0] sm:$0xff] 0.0
          %289 = vst [vmem:[#allocation2 + $0x1a8] sm:$0xff] 0.0
          %290 = vst [vmem:[#allocation2 + $0x1b0] sm:$0xff] 0.0
          %291 = vst [vmem:[#allocation2 + $0x1b8] sm:$0xff] 0.0
          %292 = vst [vmem:[#allocation2 + $0x1c0] sm:$0xff] 0.0
          %293 = vst [vmem:[#allocation2 + $0x1c8] sm:$0xff] 0.0
          %294 = vst [vmem:[#allocation2 + $0x1d0] sm:$0xff] 0.0
          %295 = vst [vmem:[#allocation2 + $0x1d8] sm:$0xff] 0.0
          %296 = vst [vmem:[#allocation2 + $0x1e0] sm:$0xff] 0.0
          %297 = vst [vmem:[#allocation2 + $0x1e8] sm:$0xff] 0.0
          %298 = vst [vmem:[#allocation2 + $0x1f0] sm:$0xff] 0.0
          %299 = vst [vmem:[#allocation2 + $0x1f8] sm:$0xff] 0.0
        $region40: #{tpu_custom_call.1} parent=27 // pred_fallthru
          _
        %v300 = vld [vmem:[#allocation2] sm:$0xff]
        %v301 = vld [vmem:[#allocation2 + $0x8] sm:$0xff]
        %v302 = vld [vmem:[#allocation2 + $0x10] sm:$0xff]
        %v303 = vld [vmem:[#allocation2 + $0x18] sm:$0xff]
        %v304 = vld [vmem:[#allocation2 + $0x20] sm:$0xff]
        %v305 = vld [vmem:[#allocation2 + $0x28] sm:$0xff]
        %v306 = vld [vmem:[#allocation2 + $0x30] sm:$0xff]
        %v307 = vld [vmem:[#allocation2 + $0x38] sm:$0xff]
        %v308 = vld [vmem:[#allocation2 + $0x40] sm:$0xff]
        %v309 = vld [vmem:[#allocation2 + $0x48] sm:$0xff]
        %v310 = vld [vmem:[#allocation2 + $0x50] sm:$0xff]
        %v311 = vld [vmem:[#allocation2 + $0x58] sm:$0xff]
        %v312 = vld [vmem:[#allocation2 + $0x60] sm:$0xff]
        %v313 = vld [vmem:[#allocation2 + $0x68] sm:$0xff]
        %v314 = vld [vmem:[#allocation2 + $0x70] sm:$0xff]
        %v315 = vld [vmem:[#allocation2 + $0x78] sm:$0xff]
        %v316 = vld [vmem:[#allocation2 + $0x80] sm:$0xff]
        %v317 = vld [vmem:[#allocation2 + $0x88] sm:$0xff]
        %v318 = vld [vmem:[#allocation2 + $0x90] sm:$0xff]
        %v319 = vld [vmem:[#allocation2 + $0x98] sm:$0xff]
        %v320 = vld [vmem:[#allocation2 + $0xa0] sm:$0xff]
        %v321 = vld [vmem:[#allocation2 + $0xa8] sm:$0xff]
        %v322 = vld [vmem:[#allocation2 + $0xb0] sm:$0xff]
        %v323 = vld [vmem:[#allocation2 + $0xb8] sm:$0xff]
        %v324 = vld [vmem:[#allocation2 + $0xc0] sm:$0xff]
        %v325 = vld [vmem:[#allocation2 + $0xc8] sm:$0xff]
        %v326 = vld [vmem:[#allocation2 + $0xd0] sm:$0xff]
        %v327 = vld [vmem:[#allocation2 + $0xd8] sm:$0xff]
        %v328 = vld [vmem:[#allocation2 + $0xe0] sm:$0xff]
        %v329 = vld [vmem:[#allocation2 + $0xe8] sm:$0xff]
        %v330 = vld [vmem:[#allocation2 + $0xf0] sm:$0xff]
        %v331 = vld [vmem:[#allocation2 + $0xf8] sm:$0xff]
        %v332 = vld [vmem:[#allocation2 + $0x100] sm:$0xff]
        %v333 = vld [vmem:[#allocation2 + $0x108] sm:$0xff]
        %v334 = vld [vmem:[#allocation2 + $0x110] sm:$0xff]
        %v335 = vld [vmem:[#allocation2 + $0x118] sm:$0xff]
        %v336 = vld [vmem:[#allocation2 + $0x120] sm:$0xff]
        %v337 = vld [vmem:[#allocation2 + $0x128] sm:$0xff]
        %v338 = vld [vmem:[#allocation2 + $0x130] sm:$0xff]
        %v339 = vld [vmem:[#allocation2 + $0x138] sm:$0xff]
        %v340 = vld [vmem:[#allocation2 + $0x140] sm:$0xff]
        %v341 = vld [vmem:[#allocation2 + $0x148] sm:$0xff]
        %v342 = vld [vmem:[#allocation2 + $0x150] sm:$0xff]
        %v343 = vld [vmem:[#allocation2 + $0x158] sm:$0xff]
        %v344 = vld [vmem:[#allocation2 + $0x160] sm:$0xff]
        %v345 = vld [vmem:[#allocation2 + $0x168] sm:$0xff]
        %v346 = vld [vmem:[#allocation2 + $0x170] sm:$0xff]
        %v347 = vld [vmem:[#allocation2 + $0x178] sm:$0xff]
        %v348 = vld [vmem:[#allocation2 + $0x180] sm:$0xff]
        %v349 = vld [vmem:[#allocation2 + $0x188] sm:$0xff]
        %v350 = vld [vmem:[#allocation2 + $0x190] sm:$0xff]
        %v351 = vld [vmem:[#allocation2 + $0x198] sm:$0xff]
        %v352 = vld [vmem:[#allocation2 + $0x1a0] sm:$0xff]
        %v353 = vld [vmem:[#allocation2 + $0x1a8] sm:$0xff]
        %v354 = vld [vmem:[#allocation2 + $0x1b0] sm:$0xff]
        %v355 = vld [vmem:[#allocation2 + $0x1b8] sm:$0xff]
        %v356 = vld [vmem:[#allocation2 + $0x1c0] sm:$0xff]
        %v357 = vld [vmem:[#allocation2 + $0x1c8] sm:$0xff]
        %v358 = vld [vmem:[#allocation2 + $0x1d0] sm:$0xff]
        %v359 = vld [vmem:[#allocation2 + $0x1d8] sm:$0xff]
        %v360 = vld [vmem:[#allocation2 + $0x1e0] sm:$0xff]
        %v361 = vld [vmem:[#allocation2 + $0x1e8] sm:$0xff]
        %v362 = vld [vmem:[#allocation2 + $0x1f0] sm:$0xff]
        %v363 = vld [vmem:[#allocation2 + $0x1f8] sm:$0xff]
        %v364 = vld [vmem:[%s196] sm:$0xff]
        %v365 = vld [vmem:[%s196 + $0x8] sm:$0xff]
        %v366 = vld [vmem:[%s196 + $0x10] sm:$0xff]
        %v367 = vld [vmem:[%s196 + $0x18] sm:$0xff]
        %v368 = vld [vmem:[%s196 + $0x20] sm:$0xff]
        %v369 = vld [vmem:[%s196 + $0x28] sm:$0xff]
        %v370 = vld [vmem:[%s196 + $0x30] sm:$0xff]
        %v371 = vld [vmem:[%s196 + $0x38] sm:$0xff]
        %v372 = vld [vmem:[%s196 + $0x40] sm:$0xff]
        %v373 = vld [vmem:[%s196 + $0x48] sm:$0xff]
        %v374 = vld [vmem:[%s196 + $0x50] sm:$0xff]
        %v375 = vld [vmem:[%s196 + $0x58] sm:$0xff]
        %v376 = vld [vmem:[%s196 + $0x60] sm:$0xff]
        %v377 = vld [vmem:[%s196 + $0x68] sm:$0xff]
        %v378 = vld [vmem:[%s196 + $0x70] sm:$0xff]
        %v379 = vld [vmem:[%s196 + $0x78] sm:$0xff]
        %v380 = vld [vmem:[%s196 + $0x80] sm:$0xff]
        %v381 = vld [vmem:[%s196 + $0x88] sm:$0xff]
        %v382 = vld [vmem:[%s196 + $0x90] sm:$0xff]
        %v383 = vld [vmem:[%s196 + $0x98] sm:$0xff]
        %v384 = vld [vmem:[%s196 + $0xa0] sm:$0xff]
        %v385 = vld [vmem:[%s196 + $0xa8] sm:$0xff]
        %v386 = vld [vmem:[%s196 + $0xb0] sm:$0xff]
        %v387 = vld [vmem:[%s196 + $0xb8] sm:$0xff]
        %v388 = vld [vmem:[%s196 + $0xc0] sm:$0xff]
        %v389 = vld [vmem:[%s196 + $0xc8] sm:$0xff]
        %v390 = vld [vmem:[%s196 + $0xd0] sm:$0xff]
        %v391 = vld [vmem:[%s196 + $0xd8] sm:$0xff]
        %v392 = vld [vmem:[%s196 + $0xe0] sm:$0xff]
        %v393 = vld [vmem:[%s196 + $0xe8] sm:$0xff]
        %v394 = vld [vmem:[%s196 + $0xf0] sm:$0xff]
        %v395 = vld [vmem:[%s196 + $0xf8] sm:$0xff]
        %v396 = vld [vmem:[%s196 + $0x100] sm:$0xff]
        %v397 = vld [vmem:[%s196 + $0x108] sm:$0xff]
        %v398 = vld [vmem:[%s196 + $0x110] sm:$0xff]
        %v399 = vld [vmem:[%s196 + $0x118] sm:$0xff]
        %v400 = vld [vmem:[%s196 + $0x120] sm:$0xff]
        %v401 = vld [vmem:[%s196 + $0x128] sm:$0xff]
        %v402 = vld [vmem:[%s196 + $0x130] sm:$0xff]
        %v403 = vld [vmem:[%s196 + $0x138] sm:$0xff]
        %v404 = vld [vmem:[%s196 + $0x140] sm:$0xff]
        %v405 = vld [vmem:[%s196 + $0x148] sm:$0xff]
        %v406 = vld [vmem:[%s196 + $0x150] sm:$0xff]
        %v407 = vld [vmem:[%s196 + $0x158] sm:$0xff]
        %v408 = vld [vmem:[%s196 + $0x160] sm:$0xff]
        %v409 = vld [vmem:[%s196 + $0x168] sm:$0xff]
        %v410 = vld [vmem:[%s196 + $0x170] sm:$0xff]
        %v411 = vld [vmem:[%s196 + $0x178] sm:$0xff]
        %v412 = vld [vmem:[%s196 + $0x180] sm:$0xff]
        %v413 = vld [vmem:[%s196 + $0x188] sm:$0xff]
        %v414 = vld [vmem:[%s196 + $0x190] sm:$0xff]
        %v415 = vld [vmem:[%s196 + $0x198] sm:$0xff]
        %v416 = vld [vmem:[%s196 + $0x1a0] sm:$0xff]
        %v417 = vld [vmem:[%s196 + $0x1a8] sm:$0xff]
        %v418 = vld [vmem:[%s196 + $0x1b0] sm:$0xff]
        %v419 = vld [vmem:[%s196 + $0x1b8] sm:$0xff]
        %v420 = vld [vmem:[%s196 + $0x1c0] sm:$0xff]
        %v421 = vld [vmem:[%s196 + $0x1c8] sm:$0xff]
        %v422 = vld [vmem:[%s196 + $0x1d0] sm:$0xff]
        %v423 = vld [vmem:[%s196 + $0x1d8] sm:$0xff]
        %v424 = vld [vmem:[%s196 + $0x1e0] sm:$0xff]
        %v425 = vld [vmem:[%s196 + $0x1e8] sm:$0xff]
        %v426 = vld [vmem:[%s196 + $0x1f0] sm:$0xff]
        %v427 = vld [vmem:[%s196 + $0x1f8] sm:$0xff]
        %v428 = vld [vmem:[%s196 + $0x200] sm:$0xff]
        %v429 = vld [vmem:[%s196 + $0x208] sm:$0xff]
        %v430 = vld [vmem:[%s196 + $0x210] sm:$0xff]
        %v431 = vld [vmem:[%s196 + $0x218] sm:$0xff]
        %v432 = vld [vmem:[%s196 + $0x220] sm:$0xff]
        %v433 = vld [vmem:[%s196 + $0x228] sm:$0xff]
        %v434 = vld [vmem:[%s196 + $0x230] sm:$0xff]
        %v435 = vld [vmem:[%s196 + $0x238] sm:$0xff]
        %v436 = vld [vmem:[%s196 + $0x240] sm:$0xff]
        %v437 = vld [vmem:[%s196 + $0x248] sm:$0xff]
        %v438 = vld [vmem:[%s196 + $0x250] sm:$0xff]
        %v439 = vld [vmem:[%s196 + $0x258] sm:$0xff]
        %v440 = vld [vmem:[%s196 + $0x260] sm:$0xff]
        %v441 = vld [vmem:[%s196 + $0x268] sm:$0xff]
        %v442 = vld [vmem:[%s196 + $0x270] sm:$0xff]
        %v443 = vld [vmem:[%s196 + $0x278] sm:$0xff]
        %v444 = vld [vmem:[%s196 + $0x280] sm:$0xff]
        %v445 = vld [vmem:[%s196 + $0x288] sm:$0xff]
        %v446 = vld [vmem:[%s196 + $0x290] sm:$0xff]
        %v447 = vld [vmem:[%s196 + $0x298] sm:$0xff]
        %v448 = vld [vmem:[%s196 + $0x2a0] sm:$0xff]
        %v449 = vld [vmem:[%s196 + $0x2a8] sm:$0xff]
        %v450 = vld [vmem:[%s196 + $0x2b0] sm:$0xff]
        %v451 = vld [vmem:[%s196 + $0x2b8] sm:$0xff]
        %v452 = vld [vmem:[%s196 + $0x2c0] sm:$0xff]
        %v453 = vld [vmem:[%s196 + $0x2c8] sm:$0xff]
        %v454 = vld [vmem:[%s196 + $0x2d0] sm:$0xff]
        %v455 = vld [vmem:[%s196 + $0x2d8] sm:$0xff]
        %v456 = vld [vmem:[%s196 + $0x2e0] sm:$0xff]
        %v457 = vld [vmem:[%s196 + $0x2e8] sm:$0xff]
        %v458 = vld [vmem:[%s196 + $0x2f0] sm:$0xff]
        %v459 = vld [vmem:[%s196 + $0x2f8] sm:$0xff]
        %v460 = vld [vmem:[%s196 + $0x300] sm:$0xff]
        %v461 = vld [vmem:[%s196 + $0x308] sm:$0xff]
        %v462 = vld [vmem:[%s196 + $0x310] sm:$0xff]
        %v463 = vld [vmem:[%s196 + $0x318] sm:$0xff]
        %v464 = vld [vmem:[%s196 + $0x320] sm:$0xff]
        %v465 = vld [vmem:[%s196 + $0x328] sm:$0xff]
        %v466 = vld [vmem:[%s196 + $0x330] sm:$0xff]
        %v467 = vld [vmem:[%s196 + $0x338] sm:$0xff]
        %v468 = vld [vmem:[%s196 + $0x340] sm:$0xff]
        %v469 = vld [vmem:[%s196 + $0x348] sm:$0xff]
        %v470 = vld [vmem:[%s196 + $0x350] sm:$0xff]
        %v471 = vld [vmem:[%s196 + $0x358] sm:$0xff]
        %v472 = vld [vmem:[%s196 + $0x360] sm:$0xff]
        %v473 = vld [vmem:[%s196 + $0x368] sm:$0xff]
        %v474 = vld [vmem:[%s196 + $0x370] sm:$0xff]
        %v475 = vld [vmem:[%s196 + $0x378] sm:$0xff]
        %v476 = vld [vmem:[%s196 + $0x380] sm:$0xff]
        %v477 = vld [vmem:[%s196 + $0x388] sm:$0xff]
        %v478 = vld [vmem:[%s196 + $0x390] sm:$0xff]
        %v479 = vld [vmem:[%s196 + $0x398] sm:$0xff]
        %v480 = vld [vmem:[%s196 + $0x3a0] sm:$0xff]
        %v481 = vld [vmem:[%s196 + $0x3a8] sm:$0xff]
        %v482 = vld [vmem:[%s196 + $0x3b0] sm:$0xff]
        %v483 = vld [vmem:[%s196 + $0x3b8] sm:$0xff]
        %v484 = vld [vmem:[%s196 + $0x3c0] sm:$0xff]
        %v485 = vld [vmem:[%s196 + $0x3c8] sm:$0xff]
        %v486 = vld [vmem:[%s196 + $0x3d0] sm:$0xff]
        %v487 = vld [vmem:[%s196 + $0x3d8] sm:$0xff]
        %v488 = vld [vmem:[%s196 + $0x3e0] sm:$0xff]
        %v489 = vld [vmem:[%s196 + $0x3e8] sm:$0xff]
        %v490 = vld [vmem:[%s196 + $0x3f0] sm:$0xff]
        %v491 = vld [vmem:[%s196 + $0x3f8] sm:$0xff]
        %v492 = vld [vmem:[%s206] sm:$0xf]
        %v493 = vld [vmem:[%s206 + $0x4] sm:$0xf]
        %v494 = vld [vmem:[%s206 + $0x8] sm:$0xf]
        %v495 = vld [vmem:[%s206 + $0xc] sm:$0xf]
        %v496 = vld [vmem:[%s206 + $0x10] sm:$0xf]
        %v497 = vld [vmem:[%s206 + $0x14] sm:$0xf]
        %v498 = vld [vmem:[%s206 + $0x18] sm:$0xf]
        %v499 = vld [vmem:[%s206 + $0x1c] sm:$0xf]
        %v500 = vld [vmem:[%s206 + $0x20] sm:$0xf]
        %v501 = vld [vmem:[%s206 + $0x24] sm:$0xf]
        %v502 = vld [vmem:[%s206 + $0x28] sm:$0xf]
        %v503 = vld [vmem:[%s206 + $0x2c] sm:$0xf]
        %v504 = vld [vmem:[%s206 + $0x30] sm:$0xf]
        %v505 = vld [vmem:[%s206 + $0x34] sm:$0xf]
        %v506 = vld [vmem:[%s206 + $0x38] sm:$0xf]
        %v507 = vld [vmem:[%s206 + $0x3c] sm:$0xf]
        %v508 = vld [vmem:[%s206 + $0x40] sm:$0xf]
        %v509 = vld [vmem:[%s206 + $0x44] sm:$0xf]
        %v510 = vld [vmem:[%s206 + $0x48] sm:$0xf]
        %v511 = vld [vmem:[%s206 + $0x4c] sm:$0xf]
        %v512 = vld [vmem:[%s206 + $0x50] sm:$0xf]
        %v513 = vld [vmem:[%s206 + $0x54] sm:$0xf]
        %v514 = vld [vmem:[%s206 + $0x58] sm:$0xf]
        %v515 = vld [vmem:[%s206 + $0x5c] sm:$0xf]
        %v516 = vld [vmem:[%s206 + $0x60] sm:$0xf]
        %v517 = vld [vmem:[%s206 + $0x64] sm:$0xf]
        %v518 = vld [vmem:[%s206 + $0x68] sm:$0xf]
        %v519 = vld [vmem:[%s206 + $0x6c] sm:$0xf]
        %v520 = vld [vmem:[%s206 + $0x70] sm:$0xf]
        %v521 = vld [vmem:[%s206 + $0x74] sm:$0xf]
        %v522 = vld [vmem:[%s206 + $0x78] sm:$0xf]
        %v523 = vld [vmem:[%s206 + $0x7c] sm:$0xf]
        %v524 = vld [vmem:[%s206 + $0x80] sm:$0xf]
        %v525 = vld [vmem:[%s206 + $0x84] sm:$0xf]
        %v526 = vld [vmem:[%s206 + $0x88] sm:$0xf]
        %v527 = vld [vmem:[%s206 + $0x8c] sm:$0xf]
        %v528 = vld [vmem:[%s206 + $0x90] sm:$0xf]
        %v529 = vld [vmem:[%s206 + $0x94] sm:$0xf]
        %v530 = vld [vmem:[%s206 + $0x98] sm:$0xf]
        %v531 = vld [vmem:[%s206 + $0x9c] sm:$0xf]
        %v532 = vld [vmem:[%s206 + $0xa0] sm:$0xf]
        %v533 = vld [vmem:[%s206 + $0xa4] sm:$0xf]
        %v534 = vld [vmem:[%s206 + $0xa8] sm:$0xf]
        %v535 = vld [vmem:[%s206 + $0xac] sm:$0xf]
        %v536 = vld [vmem:[%s206 + $0xb0] sm:$0xf]
        %v537 = vld [vmem:[%s206 + $0xb4] sm:$0xf]
        %v538 = vld [vmem:[%s206 + $0xb8] sm:$0xf]
        %v539 = vld [vmem:[%s206 + $0xbc] sm:$0xf]
        %v540 = vld [vmem:[%s206 + $0xc0] sm:$0xf]
        %v541 = vld [vmem:[%s206 + $0xc4] sm:$0xf]
        %v542 = vld [vmem:[%s206 + $0xc8] sm:$0xf]
        %v543 = vld [vmem:[%s206 + $0xcc] sm:$0xf]
        %v544 = vld [vmem:[%s206 + $0xd0] sm:$0xf]
        %v545 = vld [vmem:[%s206 + $0xd4] sm:$0xf]
        %v546 = vld [vmem:[%s206 + $0xd8] sm:$0xf]
        %v547 = vld [vmem:[%s206 + $0xdc] sm:$0xf]
        %v548 = vld [vmem:[%s206 + $0xe0] sm:$0xf]
        %v549 = vld [vmem:[%s206 + $0xe4] sm:$0xf]
        %v550 = vld [vmem:[%s206 + $0xe8] sm:$0xf]
        %v551 = vld [vmem:[%s206 + $0xec] sm:$0xf]
        %v552 = vld [vmem:[%s206 + $0xf0] sm:$0xf]
        %v553 = vld [vmem:[%s206 + $0xf4] sm:$0xf]
        %v554 = vld [vmem:[%s206 + $0xf8] sm:$0xf]
        %v555 = vld [vmem:[%s206 + $0xfc] sm:$0xf]
        %v684 = vunpack.c.l.b16 %v364
        %v685 = vunpack.c.h.b16 %v364
        %v686 = vunpack.c.l.b16 %v365
        %v687 = vunpack.c.h.b16 %v365
        %v688 = vunpack.c.l.b16 %v366
        %v689 = vunpack.c.h.b16 %v366
        %v690 = vunpack.c.l.b16 %v367
        %v691 = vunpack.c.h.b16 %v367
        %v692 = vunpack.c.l.b16 %v368
        %v693 = vunpack.c.h.b16 %v368
        %v694 = vunpack.c.l.b16 %v369
        %v695 = vunpack.c.h.b16 %v369
        %v696 = vunpack.c.l.b16 %v370
        %v697 = vunpack.c.h.b16 %v370
        %v698 = vunpack.c.l.b16 %v371
        %v699 = vunpack.c.h.b16 %v371
        %v700 = vunpack.c.l.b16 %v372
        %v701 = vunpack.c.h.b16 %v372
        %v702 = vunpack.c.l.b16 %v373
        %v703 = vunpack.c.h.b16 %v373
        %v704 = vunpack.c.l.b16 %v374
        %v705 = vunpack.c.h.b16 %v374
        %v706 = vunpack.c.l.b16 %v375
        %v707 = vunpack.c.h.b16 %v375
        %v708 = vunpack.c.l.b16 %v376
        %v709 = vunpack.c.h.b16 %v376
        %v710 = vunpack.c.l.b16 %v377
        %v711 = vunpack.c.h.b16 %v377
        %v712 = vunpack.c.l.b16 %v378
        %v713 = vunpack.c.h.b16 %v378
        %v714 = vunpack.c.l.b16 %v379
        %v715 = vunpack.c.h.b16 %v379
        %v716 = vunpack.c.l.b16 %v380
        %v717 = vunpack.c.h.b16 %v380
        %v718 = vunpack.c.l.b16 %v381
        %v719 = vunpack.c.h.b16 %v381
        %v720 = vunpack.c.l.b16 %v382
        %v721 = vunpack.c.h.b16 %v382
        %v722 = vunpack.c.l.b16 %v383
        %v723 = vunpack.c.h.b16 %v383
        %v724 = vunpack.c.l.b16 %v384
        %v725 = vunpack.c.h.b16 %v384
        %v726 = vunpack.c.l.b16 %v385
        %v727 = vunpack.c.h.b16 %v385
        %v728 = vunpack.c.l.b16 %v386
        %v729 = vunpack.c.h.b16 %v386
        %v730 = vunpack.c.l.b16 %v387
        %v731 = vunpack.c.h.b16 %v387
        %v732 = vunpack.c.l.b16 %v388
        %v733 = vunpack.c.h.b16 %v388
        %v734 = vunpack.c.l.b16 %v389
        %v735 = vunpack.c.h.b16 %v389
        %v736 = vunpack.c.l.b16 %v390
        %v737 = vunpack.c.h.b16 %v390
        %v738 = vunpack.c.l.b16 %v391
        %v739 = vunpack.c.h.b16 %v391
        %v740 = vunpack.c.l.b16 %v392
        %v741 = vunpack.c.h.b16 %v392
        %v742 = vunpack.c.l.b16 %v393
        %v743 = vunpack.c.h.b16 %v393
        %v744 = vunpack.c.l.b16 %v394
        %v745 = vunpack.c.h.b16 %v394
        %v746 = vunpack.c.l.b16 %v395
        %v747 = vunpack.c.h.b16 %v395
        %v748 = vunpack.c.l.b16 %v396
        %v749 = vunpack.c.h.b16 %v396
        %v750 = vunpack.c.l.b16 %v397
        %v751 = vunpack.c.h.b16 %v397
        %v752 = vunpack.c.l.b16 %v398
        %v753 = vunpack.c.h.b16 %v398
        %v754 = vunpack.c.l.b16 %v399
        %v755 = vunpack.c.h.b16 %v399
        %v756 = vunpack.c.l.b16 %v400
        %v757 = vunpack.c.h.b16 %v400
        %v758 = vunpack.c.l.b16 %v401
        %v759 = vunpack.c.h.b16 %v401
        %v760 = vunpack.c.l.b16 %v402
        %v761 = vunpack.c.h.b16 %v402
        %v762 = vunpack.c.l.b16 %v403
        %v763 = vunpack.c.h.b16 %v403
        %v764 = vunpack.c.l.b16 %v404
        %v765 = vunpack.c.h.b16 %v404
        %v766 = vunpack.c.l.b16 %v405
        %v767 = vunpack.c.h.b16 %v405
        %v768 = vunpack.c.l.b16 %v406
        %v769 = vunpack.c.h.b16 %v406
        %v770 = vunpack.c.l.b16 %v407
        %v771 = vunpack.c.h.b16 %v407
        %v772 = vunpack.c.l.b16 %v408
        %v773 = vunpack.c.h.b16 %v408
        %v774 = vunpack.c.l.b16 %v409
        %v775 = vunpack.c.h.b16 %v409
        %v776 = vunpack.c.l.b16 %v410
        %v777 = vunpack.c.h.b16 %v410
        %v778 = vunpack.c.l.b16 %v411
        %v779 = vunpack.c.h.b16 %v411
        %v780 = vunpack.c.l.b16 %v412
        %v781 = vunpack.c.h.b16 %v412
        %v782 = vunpack.c.l.b16 %v413
        %v783 = vunpack.c.h.b16 %v413
        %v784 = vunpack.c.l.b16 %v414
        %v785 = vunpack.c.h.b16 %v414
        %v786 = vunpack.c.l.b16 %v415
        %v787 = vunpack.c.h.b16 %v415
        %v788 = vunpack.c.l.b16 %v416
        %v789 = vunpack.c.h.b16 %v416
        %v790 = vunpack.c.l.b16 %v417
        %v791 = vunpack.c.h.b16 %v417
        %v792 = vunpack.c.l.b16 %v418
        %v793 = vunpack.c.h.b16 %v418
        %v794 = vunpack.c.l.b16 %v419
        %v795 = vunpack.c.h.b16 %v419
        %v796 = vunpack.c.l.b16 %v420
        %v797 = vunpack.c.h.b16 %v420
        %v798 = vunpack.c.l.b16 %v421
        %v799 = vunpack.c.h.b16 %v421
        %v800 = vunpack.c.l.b16 %v422
        %v801 = vunpack.c.h.b16 %v422
        %v802 = vunpack.c.l.b16 %v423
        %v803 = vunpack.c.h.b16 %v423
        %v804 = vunpack.c.l.b16 %v424
        %v805 = vunpack.c.h.b16 %v424
        %v806 = vunpack.c.l.b16 %v425
        %v807 = vunpack.c.h.b16 %v425
        %v808 = vunpack.c.l.b16 %v426
        %v809 = vunpack.c.h.b16 %v426
        %v810 = vunpack.c.l.b16 %v427
        %v811 = vunpack.c.h.b16 %v427
        %v812 = vunpack.c.l.b16 %v428
        %v813 = vunpack.c.h.b16 %v428
        %v814 = vunpack.c.l.b16 %v429
        %v815 = vunpack.c.h.b16 %v429
        %v816 = vunpack.c.l.b16 %v430
        %v817 = vunpack.c.h.b16 %v430
        %v818 = vunpack.c.l.b16 %v431
        %v819 = vunpack.c.h.b16 %v431
        %v820 = vunpack.c.l.b16 %v432
        %v821 = vunpack.c.h.b16 %v432
        %v822 = vunpack.c.l.b16 %v433
        %v823 = vunpack.c.h.b16 %v433
        %v824 = vunpack.c.l.b16 %v434
        %v825 = vunpack.c.h.b16 %v434
        %v826 = vunpack.c.l.b16 %v435
        %v827 = vunpack.c.h.b16 %v435
        %v828 = vunpack.c.l.b16 %v436
        %v829 = vunpack.c.h.b16 %v436
        %v830 = vunpack.c.l.b16 %v437
        %v831 = vunpack.c.h.b16 %v437
        %v832 = vunpack.c.l.b16 %v438
        %v833 = vunpack.c.h.b16 %v438
        %v834 = vunpack.c.l.b16 %v439
        %v835 = vunpack.c.h.b16 %v439
        %v836 = vunpack.c.l.b16 %v440
        %v837 = vunpack.c.h.b16 %v440
        %v838 = vunpack.c.l.b16 %v441
        %v839 = vunpack.c.h.b16 %v441
        %v840 = vunpack.c.l.b16 %v442
        %v841 = vunpack.c.h.b16 %v442
        %v842 = vunpack.c.l.b16 %v443
        %v843 = vunpack.c.h.b16 %v443
        %v844 = vunpack.c.l.b16 %v444
        %v845 = vunpack.c.h.b16 %v444
        %v846 = vunpack.c.l.b16 %v445
        %v847 = vunpack.c.h.b16 %v445
        %v848 = vunpack.c.l.b16 %v446
        %v849 = vunpack.c.h.b16 %v446
        %v850 = vunpack.c.l.b16 %v447
        %v851 = vunpack.c.h.b16 %v447
        %v852 = vunpack.c.l.b16 %v448
        %v853 = vunpack.c.h.b16 %v448
        %v854 = vunpack.c.l.b16 %v449
        %v855 = vunpack.c.h.b16 %v449
        %v856 = vunpack.c.l.b16 %v450
        %v857 = vunpack.c.h.b16 %v450
        %v858 = vunpack.c.l.b16 %v451
        %v859 = vunpack.c.h.b16 %v451
        %v860 = vunpack.c.l.b16 %v452
        %v861 = vunpack.c.h.b16 %v452
        %v862 = vunpack.c.l.b16 %v453
        %v863 = vunpack.c.h.b16 %v453
        %v864 = vunpack.c.l.b16 %v454
        %v865 = vunpack.c.h.b16 %v454
        %v866 = vunpack.c.l.b16 %v455
        %v867 = vunpack.c.h.b16 %v455
        %v868 = vunpack.c.l.b16 %v456
        %v869 = vunpack.c.h.b16 %v456
        %v870 = vunpack.c.l.b16 %v457
        %v871 = vunpack.c.h.b16 %v457
        %v872 = vunpack.c.l.b16 %v458
        %v873 = vunpack.c.h.b16 %v458
        %v874 = vunpack.c.l.b16 %v459
        %v875 = vunpack.c.h.b16 %v459
        %v876 = vunpack.c.l.b16 %v460
        %v877 = vunpack.c.h.b16 %v460
        %v878 = vunpack.c.l.b16 %v461
        %v879 = vunpack.c.h.b16 %v461
        %v880 = vunpack.c.l.b16 %v462
        %v881 = vunpack.c.h.b16 %v462
        %v882 = vunpack.c.l.b16 %v463
        %v883 = vunpack.c.h.b16 %v463
        %v884 = vunpack.c.l.b16 %v464
        %v885 = vunpack.c.h.b16 %v464
        %v886 = vunpack.c.l.b16 %v465
        %v887 = vunpack.c.h.b16 %v465
        %v888 = vunpack.c.l.b16 %v466
        %v889 = vunpack.c.h.b16 %v466
        %v890 = vunpack.c.l.b16 %v467
        %v891 = vunpack.c.h.b16 %v467
        %v892 = vunpack.c.l.b16 %v468
        %v893 = vunpack.c.h.b16 %v468
        %v894 = vunpack.c.l.b16 %v469
        %v895 = vunpack.c.h.b16 %v469
        %v896 = vunpack.c.l.b16 %v470
        %v897 = vunpack.c.h.b16 %v470
        %v898 = vunpack.c.l.b16 %v471
        %v899 = vunpack.c.h.b16 %v471
        %v900 = vunpack.c.l.b16 %v472
        %v901 = vunpack.c.h.b16 %v472
        %v902 = vunpack.c.l.b16 %v473
        %v903 = vunpack.c.h.b16 %v473
        %v904 = vunpack.c.l.b16 %v474
        %v905 = vunpack.c.h.b16 %v474
        %v906 = vunpack.c.l.b16 %v475
        %v907 = vunpack.c.h.b16 %v475
        %v908 = vunpack.c.l.b16 %v476
        %v909 = vunpack.c.h.b16 %v476
        %v910 = vunpack.c.l.b16 %v477
        %v911 = vunpack.c.h.b16 %v477
        %v912 = vunpack.c.l.b16 %v478
        %v913 = vunpack.c.h.b16 %v478
        %v914 = vunpack.c.l.b16 %v479
        %v915 = vunpack.c.h.b16 %v479
        %v916 = vunpack.c.l.b16 %v480
        %v917 = vunpack.c.h.b16 %v480
        %v918 = vunpack.c.l.b16 %v481
        %v919 = vunpack.c.h.b16 %v481
        %v920 = vunpack.c.l.b16 %v482
        %v921 = vunpack.c.h.b16 %v482
        %v922 = vunpack.c.l.b16 %v483
        %v923 = vunpack.c.h.b16 %v483
        %v924 = vunpack.c.l.b16 %v484
        %v925 = vunpack.c.h.b16 %v484
        %v926 = vunpack.c.l.b16 %v485
        %v927 = vunpack.c.h.b16 %v485
        %v928 = vunpack.c.l.b16 %v486
        %v929 = vunpack.c.h.b16 %v486
        %v930 = vunpack.c.l.b16 %v487
        %v931 = vunpack.c.h.b16 %v487
        %v932 = vunpack.c.l.b16 %v488
        %v933 = vunpack.c.h.b16 %v488
        %v934 = vunpack.c.l.b16 %v489
        %v935 = vunpack.c.h.b16 %v489
        %v936 = vunpack.c.l.b16 %v490
        %v937 = vunpack.c.h.b16 %v490
        %v938 = vunpack.c.l.b16 %v491
        %v939 = vunpack.c.h.b16 %v491
        %v940 = vpack.c.b16 %v688, %v684
        %v941 = vpack.c.b16 %v689, %v685
        %v942 = vpack.c.b16 %v690, %v686
        %v943 = vpack.c.b16 %v691, %v687
        %v944 = vpack.c.b16 %v696, %v692
        %v945 = vpack.c.b16 %v697, %v693
        %v946 = vpack.c.b16 %v698, %v694
        %v947 = vpack.c.b16 %v699, %v695
        %v948 = vpack.c.b16 %v704, %v700
        %v949 = vpack.c.b16 %v705, %v701
        %v950 = vpack.c.b16 %v706, %v702
        %v951 = vpack.c.b16 %v707, %v703
        %v952 = vpack.c.b16 %v712, %v708
        %v953 = vpack.c.b16 %v713, %v709
        %v954 = vpack.c.b16 %v714, %v710
        %v955 = vpack.c.b16 %v715, %v711
        %v956 = vpack.c.b16 %v720, %v716
        %v957 = vpack.c.b16 %v721, %v717
        %v958 = vpack.c.b16 %v722, %v718
        %v959 = vpack.c.b16 %v723, %v719
        %v960 = vpack.c.b16 %v728, %v724
        %v961 = vpack.c.b16 %v729, %v725
        %v962 = vpack.c.b16 %v730, %v726
        %v963 = vpack.c.b16 %v731, %v727
        %v964 = vpack.c.b16 %v736, %v732
        %v965 = vpack.c.b16 %v737, %v733
        %v966 = vpack.c.b16 %v738, %v734
        %v967 = vpack.c.b16 %v739, %v735
        %v968 = vpack.c.b16 %v744, %v740
        %v969 = vpack.c.b16 %v745, %v741
        %v970 = vpack.c.b16 %v746, %v742
        %v971 = vpack.c.b16 %v747, %v743
        %v972 = vpack.c.b16 %v752, %v748
        %v973 = vpack.c.b16 %v753, %v749
        %v974 = vpack.c.b16 %v754, %v750
        %v975 = vpack.c.b16 %v755, %v751
        %v976 = vpack.c.b16 %v760, %v756
        %v977 = vpack.c.b16 %v761, %v757
        %v978 = vpack.c.b16 %v762, %v758
        %v979 = vpack.c.b16 %v763, %v759
        %v980 = vpack.c.b16 %v768, %v764
        %v981 = vpack.c.b16 %v769, %v765
        %v982 = vpack.c.b16 %v770, %v766
        %v983 = vpack.c.b16 %v771, %v767
        %v984 = vpack.c.b16 %v776, %v772
        %v985 = vpack.c.b16 %v777, %v773
        %v986 = vpack.c.b16 %v778, %v774
        %v987 = vpack.c.b16 %v779, %v775
        %v988 = vpack.c.b16 %v784, %v780
        %v989 = vpack.c.b16 %v785, %v781
        %v990 = vpack.c.b16 %v786, %v782
        %v991 = vpack.c.b16 %v787, %v783
        %v992 = vpack.c.b16 %v792, %v788
        %v993 = vpack.c.b16 %v793, %v789
        %v994 = vpack.c.b16 %v794, %v790
        %v995 = vpack.c.b16 %v795, %v791
        %v996 = vpack.c.b16 %v800, %v796
        %v997 = vpack.c.b16 %v801, %v797
        %v998 = vpack.c.b16 %v802, %v798
        %v999 = vpack.c.b16 %v803, %v799
        %v1000 = vpack.c.b16 %v808, %v804
        %v1001 = vpack.c.b16 %v809, %v805
        %v1002 = vpack.c.b16 %v810, %v806
        %v1003 = vpack.c.b16 %v811, %v807
        %v1004 = vpack.c.b16 %v816, %v812
        %v1005 = vpack.c.b16 %v817, %v813
        %v1006 = vpack.c.b16 %v818, %v814
        %v1007 = vpack.c.b16 %v819, %v815
        %v1008 = vpack.c.b16 %v824, %v820
        %v1009 = vpack.c.b16 %v825, %v821
        %v1010 = vpack.c.b16 %v826, %v822
        %v1011 = vpack.c.b16 %v827, %v823
        %v1012 = vpack.c.b16 %v832, %v828
        %v1013 = vpack.c.b16 %v833, %v829
        %v1014 = vpack.c.b16 %v834, %v830
        %v1015 = vpack.c.b16 %v835, %v831
        %v1016 = vpack.c.b16 %v840, %v836
        %v1017 = vpack.c.b16 %v841, %v837
        %v1018 = vpack.c.b16 %v842, %v838
        %v1019 = vpack.c.b16 %v843, %v839
        %v1020 = vpack.c.b16 %v848, %v844
        %v1021 = vpack.c.b16 %v849, %v845
        %v1022 = vpack.c.b16 %v850, %v846
        %v1023 = vpack.c.b16 %v851, %v847
        %v1024 = vpack.c.b16 %v856, %v852
        %v1025 = vpack.c.b16 %v857, %v853
        %v1026 = vpack.c.b16 %v858, %v854
        %v1027 = vpack.c.b16 %v859, %v855
        %v1028 = vpack.c.b16 %v864, %v860
        %v1029 = vpack.c.b16 %v865, %v861
        %v1030 = vpack.c.b16 %v866, %v862
        %v1031 = vpack.c.b16 %v867, %v863
        %v1032 = vpack.c.b16 %v872, %v868
        %v1033 = vpack.c.b16 %v873, %v869
        %v1034 = vpack.c.b16 %v874, %v870
        %v1035 = vpack.c.b16 %v875, %v871
        %v1036 = vpack.c.b16 %v880, %v876
        %v1037 = vpack.c.b16 %v881, %v877
        %v1038 = vpack.c.b16 %v882, %v878
        %v1039 = vpack.c.b16 %v883, %v879
        %v1040 = vpack.c.b16 %v888, %v884
        %v1041 = vpack.c.b16 %v889, %v885
        %v1042 = vpack.c.b16 %v890, %v886
        %v1043 = vpack.c.b16 %v891, %v887
        %v1044 = vpack.c.b16 %v896, %v892
        %v1045 = vpack.c.b16 %v897, %v893
        %v1046 = vpack.c.b16 %v898, %v894
        %v1047 = vpack.c.b16 %v899, %v895
        %v1048 = vpack.c.b16 %v904, %v900
        %v1049 = vpack.c.b16 %v905, %v901
        %v1050 = vpack.c.b16 %v906, %v902
        %v1051 = vpack.c.b16 %v907, %v903
        %v1052 = vpack.c.b16 %v912, %v908
        %v1053 = vpack.c.b16 %v913, %v909
        %v1054 = vpack.c.b16 %v914, %v910
        %v1055 = vpack.c.b16 %v915, %v911
        %v1056 = vpack.c.b16 %v920, %v916
        %v1057 = vpack.c.b16 %v921, %v917
        %v1058 = vpack.c.b16 %v922, %v918
        %v1059 = vpack.c.b16 %v923, %v919
        %v1060 = vpack.c.b16 %v928, %v924
        %v1061 = vpack.c.b16 %v929, %v925
        %v1062 = vpack.c.b16 %v930, %v926
        %v1063 = vpack.c.b16 %v931, %v927
        %v1064 = vpack.c.b16 %v936, %v932
        %v1065 = vpack.c.b16 %v937, %v933
        %v1066 = vpack.c.b16 %v938, %v934
        %v1067 = vpack.c.b16 %v939, %v935
        %v1260 = vunpack.c.l.b16 %v492
        %v1261 = vunpack.c.l.b16 %v493
        %v1262 = vunpack.c.l.b16 %v494
        %v1263 = vunpack.c.l.b16 %v495
        %v1264 = vunpack.c.l.b16 %v496
        %v1265 = vunpack.c.l.b16 %v497
        %v1266 = vunpack.c.l.b16 %v498
        %v1267 = vunpack.c.l.b16 %v499
        %v1268 = vunpack.c.l.b16 %v500
        %v1269 = vunpack.c.l.b16 %v501
        %v1270 = vunpack.c.l.b16 %v502
        %v1271 = vunpack.c.l.b16 %v503
        %v1272 = vunpack.c.l.b16 %v504
        %v1273 = vunpack.c.l.b16 %v505
        %v1274 = vunpack.c.l.b16 %v506
        %v1275 = vunpack.c.l.b16 %v507
        %v1276 = vunpack.c.l.b16 %v508
        %v1277 = vunpack.c.l.b16 %v509
        %v1278 = vunpack.c.l.b16 %v510
        %v1279 = vunpack.c.l.b16 %v511
        %v1280 = vunpack.c.l.b16 %v512
        %v1281 = vunpack.c.l.b16 %v513
        %v1282 = vunpack.c.l.b16 %v514
        %v1283 = vunpack.c.l.b16 %v515
        %v1284 = vunpack.c.l.b16 %v516
        %v1285 = vunpack.c.l.b16 %v517
        %v1286 = vunpack.c.l.b16 %v518
        %v1287 = vunpack.c.l.b16 %v519
        %v1288 = vunpack.c.l.b16 %v520
        %v1289 = vunpack.c.l.b16 %v521
        %v1290 = vunpack.c.l.b16 %v522
        %v1291 = vunpack.c.l.b16 %v523
        %v1292 = vunpack.c.l.b16 %v524
        %v1293 = vunpack.c.l.b16 %v525
        %v1294 = vunpack.c.l.b16 %v526
        %v1295 = vunpack.c.l.b16 %v527
        %v1296 = vunpack.c.l.b16 %v528
        %v1297 = vunpack.c.l.b16 %v529
        %v1298 = vunpack.c.l.b16 %v530
        %v1299 = vunpack.c.l.b16 %v531
        %v1300 = vunpack.c.l.b16 %v532
        %v1301 = vunpack.c.l.b16 %v533
        %v1302 = vunpack.c.l.b16 %v534
        %v1303 = vunpack.c.l.b16 %v535
        %v1304 = vunpack.c.l.b16 %v536
        %v1305 = vunpack.c.l.b16 %v537
        %v1306 = vunpack.c.l.b16 %v538
        %v1307 = vunpack.c.l.b16 %v539
        %v1308 = vunpack.c.l.b16 %v540
        %v1309 = vunpack.c.l.b16 %v541
        %v1310 = vunpack.c.l.b16 %v542
        %v1311 = vunpack.c.l.b16 %v543
        %v1312 = vunpack.c.l.b16 %v544
        %v1313 = vunpack.c.l.b16 %v545
        %v1314 = vunpack.c.l.b16 %v546
        %v1315 = vunpack.c.l.b16 %v547
        %v1316 = vunpack.c.l.b16 %v548
        %v1317 = vunpack.c.l.b16 %v549
        %v1318 = vunpack.c.l.b16 %v550
        %v1319 = vunpack.c.l.b16 %v551
        %v1320 = vunpack.c.l.b16 %v552
        %v1321 = vunpack.c.l.b16 %v553
        %v1322 = vunpack.c.l.b16 %v554
        %v1323 = vunpack.c.l.b16 %v555
        %v1324 = vpack.c.b16 %v1261, %v1260
        %v1325 = vpack.c.b16 %v1263, %v1262
        %v1326 = vpack.c.b16 %v1265, %v1264
        %v1327 = vpack.c.b16 %v1267, %v1266
        %v1328 = vpack.c.b16 %v1269, %v1268
        %v1329 = vpack.c.b16 %v1271, %v1270
        %v1330 = vpack.c.b16 %v1273, %v1272
        %v1331 = vpack.c.b16 %v1275, %v1274
        %v1332 = vpack.c.b16 %v1277, %v1276
        %v1333 = vpack.c.b16 %v1279, %v1278
        %v1334 = vpack.c.b16 %v1281, %v1280
        %v1335 = vpack.c.b16 %v1283, %v1282
        %v1336 = vpack.c.b16 %v1285, %v1284
        %v1337 = vpack.c.b16 %v1287, %v1286
        %v1338 = vpack.c.b16 %v1289, %v1288
        %v1339 = vpack.c.b16 %v1291, %v1290
        %v1340 = vpack.c.b16 %v1293, %v1292
        %v1341 = vpack.c.b16 %v1295, %v1294
        %v1342 = vpack.c.b16 %v1297, %v1296
        %v1343 = vpack.c.b16 %v1299, %v1298
        %v1344 = vpack.c.b16 %v1301, %v1300
        %v1345 = vpack.c.b16 %v1303, %v1302
        %v1346 = vpack.c.b16 %v1305, %v1304
        %v1347 = vpack.c.b16 %v1307, %v1306
        %v1348 = vpack.c.b16 %v1309, %v1308
        %v1349 = vpack.c.b16 %v1311, %v1310
        %v1350 = vpack.c.b16 %v1313, %v1312
        %v1351 = vpack.c.b16 %v1315, %v1314
        %v1352 = vpack.c.b16 %v1317, %v1316
        %v1353 = vpack.c.b16 %v1319, %v1318
        %v1354 = vpack.c.b16 %v1321, %v1320
        %v1355 = vpack.c.b16 %v1323, %v1322
        %1388 = vmatpush.bf16.msra.mxu0 %v1331
        %1389 = vmatpush.bf16.msra.mxu0 %v1330
        %1390 = vmatpush.bf16.msra.mxu0 %v1329
        %1391 = vmatpush.bf16.msra.mxu0 %v1328
        %1392 = vmatpush.bf16.msra.mxu0 %v1327
        %1393 = vmatpush.bf16.msra.mxu0 %v1326
        %1394 = vmatpush.bf16.msra.mxu0 %v1325
        %1395 = vmatpush.bf16.msra.mxu0 %v1324
        %1396 = vmatmul.bf16.gmra.mxu0 %v940
        %v1397 = vpop.f32.mrf.mxu0
        %v1398 = vadd.f32 0.0, %v1397
        %v1399 = vpop.f32.mrf.mxu0
        %v1400 = vadd.f32 0.0, %v1399
        %1401 = vmatmul.bf16.gmra.mxu0 %v944
        %v1402 = vpop.f32.mrf.mxu0
        %v1403 = vadd.f32 0.0, %v1402
        %v1404 = vpop.f32.mrf.mxu0
        %v1405 = vadd.f32 0.0, %v1404
        %1406 = vmatmul.bf16.gmra.mxu0 %v948
        %v1407 = vpop.f32.mrf.mxu0
        %v1408 = vadd.f32 0.0, %v1407
        %v1409 = vpop.f32.mrf.mxu0
        %v1410 = vadd.f32 0.0, %v1409
        %1411 = vmatmul.bf16.gmra.mxu0 %v952
        %v1412 = vpop.f32.mrf.mxu0
        %v1413 = vadd.f32 0.0, %v1412
        %v1414 = vpop.f32.mrf.mxu0
        %v1415 = vadd.f32 0.0, %v1414
        %1416 = vmatmul.bf16.gmra.mxu0 %v956
        %v1417 = vpop.f32.mrf.mxu0
        %v1418 = vadd.f32 0.0, %v1417
        %v1419 = vpop.f32.mrf.mxu0
        %v1420 = vadd.f32 0.0, %v1419
        %1421 = vmatmul.bf16.gmra.mxu0 %v960
        %v1422 = vpop.f32.mrf.mxu0
        %v1423 = vadd.f32 0.0, %v1422
        %v1424 = vpop.f32.mrf.mxu0
        %v1425 = vadd.f32 0.0, %v1424
        %1426 = vmatmul.bf16.gmra.mxu0 %v964
        %v1427 = vpop.f32.mrf.mxu0
        %v1428 = vadd.f32 0.0, %v1427
        %v1429 = vpop.f32.mrf.mxu0
        %v1430 = vadd.f32 0.0, %v1429
        %1431 = vmatmul.bf16.gmra.mxu0 %v968
        %v1432 = vpop.f32.mrf.mxu0
        %v1433 = vadd.f32 0.0, %v1432
        %v1434 = vpop.f32.mrf.mxu0
        %v1435 = vadd.f32 0.0, %v1434
        %1436 = vmatmul.bf16.gmra.mxu0 %v972
        %v1437 = vpop.f32.mrf.mxu0
        %v1438 = vadd.f32 0.0, %v1437
        %v1439 = vpop.f32.mrf.mxu0
        %v1440 = vadd.f32 0.0, %v1439
        %1441 = vmatmul.bf16.gmra.mxu0 %v976
        %v1442 = vpop.f32.mrf.mxu0
        %v1443 = vadd.f32 0.0, %v1442
        %v1444 = vpop.f32.mrf.mxu0
        %v1445 = vadd.f32 0.0, %v1444
        %1446 = vmatmul.bf16.gmra.mxu0 %v980
        %v1447 = vpop.f32.mrf.mxu0
        %v1448 = vadd.f32 0.0, %v1447
        %v1449 = vpop.f32.mrf.mxu0
        %v1450 = vadd.f32 0.0, %v1449
        %1451 = vmatmul.bf16.gmra.mxu0 %v984
        %v1452 = vpop.f32.mrf.mxu0
        %v1453 = vadd.f32 0.0, %v1452
        %v1454 = vpop.f32.mrf.mxu0
        %v1455 = vadd.f32 0.0, %v1454
        %1456 = vmatmul.bf16.gmra.mxu0 %v988
        %v1457 = vpop.f32.mrf.mxu0
        %v1458 = vadd.f32 0.0, %v1457
        %v1459 = vpop.f32.mrf.mxu0
        %v1460 = vadd.f32 0.0, %v1459
        %1461 = vmatmul.bf16.gmra.mxu0 %v992
        %v1462 = vpop.f32.mrf.mxu0
        %v1463 = vadd.f32 0.0, %v1462
        %v1464 = vpop.f32.mrf.mxu0
        %v1465 = vadd.f32 0.0, %v1464
        %1466 = vmatmul.bf16.gmra.mxu0 %v996
        %v1467 = vpop.f32.mrf.mxu0
        %v1468 = vadd.f32 0.0, %v1467
        %v1469 = vpop.f32.mrf.mxu0
        %v1470 = vadd.f32 0.0, %v1469
        %1471 = vmatmul.bf16.gmra.mxu0 %v1000
        %v1472 = vpop.f32.mrf.mxu0
        %v1473 = vadd.f32 0.0, %v1472
        %v1474 = vpop.f32.mrf.mxu0
        %v1475 = vadd.f32 0.0, %v1474
        %1476 = vmatmul.bf16.gmra.mxu0 %v1004
        %v1477 = vpop.f32.mrf.mxu0
        %v1478 = vadd.f32 0.0, %v1477
        %v1479 = vpop.f32.mrf.mxu0
        %v1480 = vadd.f32 0.0, %v1479
        %1481 = vmatmul.bf16.gmra.mxu0 %v1008
        %v1482 = vpop.f32.mrf.mxu0
        %v1483 = vadd.f32 0.0, %v1482
        %v1484 = vpop.f32.mrf.mxu0
        %v1485 = vadd.f32 0.0, %v1484
        %1486 = vmatmul.bf16.gmra.mxu0 %v1012
        %v1487 = vpop.f32.mrf.mxu0
        %v1488 = vadd.f32 0.0, %v1487
        %v1489 = vpop.f32.mrf.mxu0
        %v1490 = vadd.f32 0.0, %v1489
        %1491 = vmatmul.bf16.gmra.mxu0 %v1016
        %v1492 = vpop.f32.mrf.mxu0
        %v1493 = vadd.f32 0.0, %v1492
        %v1494 = vpop.f32.mrf.mxu0
        %v1495 = vadd.f32 0.0, %v1494
        %1496 = vmatmul.bf16.gmra.mxu0 %v1020
        %v1497 = vpop.f32.mrf.mxu0
        %v1498 = vadd.f32 0.0, %v1497
        %v1499 = vpop.f32.mrf.mxu0
        %v1500 = vadd.f32 0.0, %v1499
        %1501 = vmatmul.bf16.gmra.mxu0 %v1024
        %v1502 = vpop.f32.mrf.mxu0
        %v1503 = vadd.f32 0.0, %v1502
        %v1504 = vpop.f32.mrf.mxu0
        %v1505 = vadd.f32 0.0, %v1504
        %1506 = vmatmul.bf16.gmra.mxu0 %v1028
        %v1507 = vpop.f32.mrf.mxu0
        %v1508 = vadd.f32 0.0, %v1507
        %v1509 = vpop.f32.mrf.mxu0
        %v1510 = vadd.f32 0.0, %v1509
        %1511 = vmatmul.bf16.gmra.mxu0 %v1032
        %v1512 = vpop.f32.mrf.mxu0
        %v1513 = vadd.f32 0.0, %v1512
        %v1514 = vpop.f32.mrf.mxu0
        %v1515 = vadd.f32 0.0, %v1514
        %1516 = vmatmul.bf16.gmra.mxu0 %v1036
        %v1517 = vpop.f32.mrf.mxu0
        %v1518 = vadd.f32 0.0, %v1517
        %v1519 = vpop.f32.mrf.mxu0
        %v1520 = vadd.f32 0.0, %v1519
        %1521 = vmatmul.bf16.gmra.mxu0 %v1040
        %v1522 = vpop.f32.mrf.mxu0
        %v1523 = vadd.f32 0.0, %v1522
        %v1524 = vpop.f32.mrf.mxu0
        %v1525 = vadd.f32 0.0, %v1524
        %1526 = vmatmul.bf16.gmra.mxu0 %v1044
        %v1527 = vpop.f32.mrf.mxu0
        %v1528 = vadd.f32 0.0, %v1527
        %v1529 = vpop.f32.mrf.mxu0
        %v1530 = vadd.f32 0.0, %v1529
        %1531 = vmatmul.bf16.gmra.mxu0 %v1048
        %v1532 = vpop.f32.mrf.mxu0
        %v1533 = vadd.f32 0.0, %v1532
        %v1534 = vpop.f32.mrf.mxu0
        %v1535 = vadd.f32 0.0, %v1534
        %1536 = vmatmul.bf16.gmra.mxu0 %v1052
        %v1537 = vpop.f32.mrf.mxu0
        %v1538 = vadd.f32 0.0, %v1537
        %v1539 = vpop.f32.mrf.mxu0
        %v1540 = vadd.f32 0.0, %v1539
        %1541 = vmatmul.bf16.gmra.mxu0 %v1056
        %v1542 = vpop.f32.mrf.mxu0
        %v1543 = vadd.f32 0.0, %v1542
        %v1544 = vpop.f32.mrf.mxu0
        %v1545 = vadd.f32 0.0, %v1544
        %1546 = vmatmul.bf16.gmra.mxu0 %v1060
        %v1547 = vpop.f32.mrf.mxu0
        %v1548 = vadd.f32 0.0, %v1547
        %v1549 = vpop.f32.mrf.mxu0
        %v1550 = vadd.f32 0.0, %v1549
        %1551 = vmatmul.bf16.gmra.mxu0 %v1064
        %v1552 = vpop.f32.mrf.mxu0
        %v1553 = vadd.f32 0.0, %v1552
        %v1554 = vpop.f32.mrf.mxu0
        %v1555 = vadd.f32 0.0, %v1554
        %1556 = vdwg.mxu0
        %1557 = vmatpush.bf16.msra.mxu0 %v1339
        %1558 = vmatpush.bf16.msra.mxu0 %v1338
        %1559 = vmatpush.bf16.msra.mxu0 %v1337
        %1560 = vmatpush.bf16.msra.mxu0 %v1336
        %1561 = vmatpush.bf16.msra.mxu0 %v1335
        %1562 = vmatpush.bf16.msra.mxu0 %v1334
        %1563 = vmatpush.bf16.msra.mxu0 %v1333
        %1564 = vmatpush.bf16.msra.mxu0 %v1332
        %1565 = vmatmul.bf16.gmra.mxu0 %v941
        %v1566 = vpop.f32.mrf.mxu0
        %v1567 = vadd.f32 %v1398, %v1566
        %v1568 = vpop.f32.mrf.mxu0
        %v1569 = vadd.f32 %v1400, %v1568
        %1570 = vmatmul.bf16.gmra.mxu0 %v945
        %v1571 = vpop.f32.mrf.mxu0
        %v1572 = vadd.f32 %v1403, %v1571
        %v1573 = vpop.f32.mrf.mxu0
        %v1574 = vadd.f32 %v1405, %v1573
        %1575 = vmatmul.bf16.gmra.mxu0 %v949
        %v1576 = vpop.f32.mrf.mxu0
        %v1577 = vadd.f32 %v1408, %v1576
        %v1578 = vpop.f32.mrf.mxu0
        %v1579 = vadd.f32 %v1410, %v1578
        %1580 = vmatmul.bf16.gmra.mxu0 %v953
        %v1581 = vpop.f32.mrf.mxu0
        %v1582 = vadd.f32 %v1413, %v1581
        %v1583 = vpop.f32.mrf.mxu0
        %v1584 = vadd.f32 %v1415, %v1583
        %1585 = vmatmul.bf16.gmra.mxu0 %v957
        %v1586 = vpop.f32.mrf.mxu0
        %v1587 = vadd.f32 %v1418, %v1586
        %v1588 = vpop.f32.mrf.mxu0
        %v1589 = vadd.f32 %v1420, %v1588
        %1590 = vmatmul.bf16.gmra.mxu0 %v961
        %v1591 = vpop.f32.mrf.mxu0
        %v1592 = vadd.f32 %v1423, %v1591
        %v1593 = vpop.f32.mrf.mxu0
        %v1594 = vadd.f32 %v1425, %v1593
        %1595 = vmatmul.bf16.gmra.mxu0 %v965
        %v1596 = vpop.f32.mrf.mxu0
        %v1597 = vadd.f32 %v1428, %v1596
        %v1598 = vpop.f32.mrf.mxu0
        %v1599 = vadd.f32 %v1430, %v1598
        %1600 = vmatmul.bf16.gmra.mxu0 %v969
        %v1601 = vpop.f32.mrf.mxu0
        %v1602 = vadd.f32 %v1433, %v1601
        %v1603 = vpop.f32.mrf.mxu0
        %v1604 = vadd.f32 %v1435, %v1603
        %1605 = vmatmul.bf16.gmra.mxu0 %v973
        %v1606 = vpop.f32.mrf.mxu0
        %v1607 = vadd.f32 %v1438, %v1606
        %v1608 = vpop.f32.mrf.mxu0
        %v1609 = vadd.f32 %v1440, %v1608
        %1610 = vmatmul.bf16.gmra.mxu0 %v977
        %v1611 = vpop.f32.mrf.mxu0
        %v1612 = vadd.f32 %v1443, %v1611
        %v1613 = vpop.f32.mrf.mxu0
        %v1614 = vadd.f32 %v1445, %v1613
        %1615 = vmatmul.bf16.gmra.mxu0 %v981
        %v1616 = vpop.f32.mrf.mxu0
        %v1617 = vadd.f32 %v1448, %v1616
        %v1618 = vpop.f32.mrf.mxu0
        %v1619 = vadd.f32 %v1450, %v1618
        %1620 = vmatmul.bf16.gmra.mxu0 %v985
        %v1621 = vpop.f32.mrf.mxu0
        %v1622 = vadd.f32 %v1453, %v1621
        %v1623 = vpop.f32.mrf.mxu0
        %v1624 = vadd.f32 %v1455, %v1623
        %1625 = vmatmul.bf16.gmra.mxu0 %v989
        %v1626 = vpop.f32.mrf.mxu0
        %v1627 = vadd.f32 %v1458, %v1626
        %v1628 = vpop.f32.mrf.mxu0
        %v1629 = vadd.f32 %v1460, %v1628
        %1630 = vmatmul.bf16.gmra.mxu0 %v993
        %v1631 = vpop.f32.mrf.mxu0
        %v1632 = vadd.f32 %v1463, %v1631
        %v1633 = vpop.f32.mrf.mxu0
        %v1634 = vadd.f32 %v1465, %v1633
        %1635 = vmatmul.bf16.gmra.mxu0 %v997
        %v1636 = vpop.f32.mrf.mxu0
        %v1637 = vadd.f32 %v1468, %v1636
        %v1638 = vpop.f32.mrf.mxu0
        %v1639 = vadd.f32 %v1470, %v1638
        %1640 = vmatmul.bf16.gmra.mxu0 %v1001
        %v1641 = vpop.f32.mrf.mxu0
        %v1642 = vadd.f32 %v1473, %v1641
        %v1643 = vpop.f32.mrf.mxu0
        %v1644 = vadd.f32 %v1475, %v1643
        %1645 = vmatmul.bf16.gmra.mxu0 %v1005
        %v1646 = vpop.f32.mrf.mxu0
        %v1647 = vadd.f32 %v1478, %v1646
        %v1648 = vpop.f32.mrf.mxu0
        %v1649 = vadd.f32 %v1480, %v1648
        %1650 = vmatmul.bf16.gmra.mxu0 %v1009
        %v1651 = vpop.f32.mrf.mxu0
        %v1652 = vadd.f32 %v1483, %v1651
        %v1653 = vpop.f32.mrf.mxu0
        %v1654 = vadd.f32 %v1485, %v1653
        %1655 = vmatmul.bf16.gmra.mxu0 %v1013
        %v1656 = vpop.f32.mrf.mxu0
        %v1657 = vadd.f32 %v1488, %v1656
        %v1658 = vpop.f32.mrf.mxu0
        %v1659 = vadd.f32 %v1490, %v1658
        %1660 = vmatmul.bf16.gmra.mxu0 %v1017
        %v1661 = vpop.f32.mrf.mxu0
        %v1662 = vadd.f32 %v1493, %v1661
        %v1663 = vpop.f32.mrf.mxu0
        %v1664 = vadd.f32 %v1495, %v1663
        %1665 = vmatmul.bf16.gmra.mxu0 %v1021
        %v1666 = vpop.f32.mrf.mxu0
        %v1667 = vadd.f32 %v1498, %v1666
        %v1668 = vpop.f32.mrf.mxu0
        %v1669 = vadd.f32 %v1500, %v1668
        %1670 = vmatmul.bf16.gmra.mxu0 %v1025
        %v1671 = vpop.f32.mrf.mxu0
        %v1672 = vadd.f32 %v1503, %v1671
        %v1673 = vpop.f32.mrf.mxu0
        %v1674 = vadd.f32 %v1505, %v1673
        %1675 = vmatmul.bf16.gmra.mxu0 %v1029
        %v1676 = vpop.f32.mrf.mxu0
        %v1677 = vadd.f32 %v1508, %v1676
        %v1678 = vpop.f32.mrf.mxu0
        %v1679 = vadd.f32 %v1510, %v1678
        %1680 = vmatmul.bf16.gmra.mxu0 %v1033
        %v1681 = vpop.f32.mrf.mxu0
        %v1682 = vadd.f32 %v1513, %v1681
        %v1683 = vpop.f32.mrf.mxu0
        %v1684 = vadd.f32 %v1515, %v1683
        %1685 = vmatmul.bf16.gmra.mxu0 %v1037
        %v1686 = vpop.f32.mrf.mxu0
        %v1687 = vadd.f32 %v1518, %v1686
        %v1688 = vpop.f32.mrf.mxu0
        %v1689 = vadd.f32 %v1520, %v1688
        %1690 = vmatmul.bf16.gmra.mxu0 %v1041
        %v1691 = vpop.f32.mrf.mxu0
        %v1692 = vadd.f32 %v1523, %v1691
        %v1693 = vpop.f32.mrf.mxu0
        %v1694 = vadd.f32 %v1525, %v1693
        %1695 = vmatmul.bf16.gmra.mxu0 %v1045
        %v1696 = vpop.f32.mrf.mxu0
        %v1697 = vadd.f32 %v1528, %v1696
        %v1698 = vpop.f32.mrf.mxu0
        %v1699 = vadd.f32 %v1530, %v1698
        %1700 = vmatmul.bf16.gmra.mxu0 %v1049
        %v1701 = vpop.f32.mrf.mxu0
        %v1702 = vadd.f32 %v1533, %v1701
        %v1703 = vpop.f32.mrf.mxu0
        %v1704 = vadd.f32 %v1535, %v1703
        %1705 = vmatmul.bf16.gmra.mxu0 %v1053
        %v1706 = vpop.f32.mrf.mxu0
        %v1707 = vadd.f32 %v1538, %v1706
        %v1708 = vpop.f32.mrf.mxu0
        %v1709 = vadd.f32 %v1540, %v1708
        %1710 = vmatmul.bf16.gmra.mxu0 %v1057
        %v1711 = vpop.f32.mrf.mxu0
        %v1712 = vadd.f32 %v1543, %v1711
        %v1713 = vpop.f32.mrf.mxu0
        %v1714 = vadd.f32 %v1545, %v1713
        %1715 = vmatmul.bf16.gmra.mxu0 %v1061
        %v1716 = vpop.f32.mrf.mxu0
        %v1717 = vadd.f32 %v1548, %v1716
        %v1718 = vpop.f32.mrf.mxu0
        %v1719 = vadd.f32 %v1550, %v1718
        %1720 = vmatmul.bf16.gmra.mxu0 %v1065
        %v1721 = vpop.f32.mrf.mxu0
        %v1722 = vadd.f32 %v1553, %v1721
        %v1723 = vpop.f32.mrf.mxu0
        %v1724 = vadd.f32 %v1555, %v1723
        %1725 = vdwg.mxu0
        %1726 = vmatpush.bf16.msra.mxu0 %v1347
        %1727 = vmatpush.bf16.msra.mxu0 %v1346
        %1728 = vmatpush.bf16.msra.mxu0 %v1345
        %1729 = vmatpush.bf16.msra.mxu0 %v1344
        %1730 = vmatpush.bf16.msra.mxu0 %v1343
        %1731 = vmatpush.bf16.msra.mxu0 %v1342
        %1732 = vmatpush.bf16.msra.mxu0 %v1341
        %1733 = vmatpush.bf16.msra.mxu0 %v1340
        %1734 = vmatmul.bf16.gmra.mxu0 %v942
        %v1735 = vpop.f32.mrf.mxu0
        %v1736 = vadd.f32 %v1567, %v1735
        %v1737 = vpop.f32.mrf.mxu0
        %v1738 = vadd.f32 %v1569, %v1737
        %1739 = vmatmul.bf16.gmra.mxu0 %v946
        %v1740 = vpop.f32.mrf.mxu0
        %v1741 = vadd.f32 %v1572, %v1740
        %v1742 = vpop.f32.mrf.mxu0
        %v1743 = vadd.f32 %v1574, %v1742
        %1744 = vmatmul.bf16.gmra.mxu0 %v950
        %v1745 = vpop.f32.mrf.mxu0
        %v1746 = vadd.f32 %v1577, %v1745
        %v1747 = vpop.f32.mrf.mxu0
        %v1748 = vadd.f32 %v1579, %v1747
        %1749 = vmatmul.bf16.gmra.mxu0 %v954
        %v1750 = vpop.f32.mrf.mxu0
        %v1751 = vadd.f32 %v1582, %v1750
        %v1752 = vpop.f32.mrf.mxu0
        %v1753 = vadd.f32 %v1584, %v1752
        %1754 = vmatmul.bf16.gmra.mxu0 %v958
        %v1755 = vpop.f32.mrf.mxu0
        %v1756 = vadd.f32 %v1587, %v1755
        %v1757 = vpop.f32.mrf.mxu0
        %v1758 = vadd.f32 %v1589, %v1757
        %1759 = vmatmul.bf16.gmra.mxu0 %v962
        %v1760 = vpop.f32.mrf.mxu0
        %v1761 = vadd.f32 %v1592, %v1760
        %v1762 = vpop.f32.mrf.mxu0
        %v1763 = vadd.f32 %v1594, %v1762
        %1764 = vmatmul.bf16.gmra.mxu0 %v966
        %v1765 = vpop.f32.mrf.mxu0
        %v1766 = vadd.f32 %v1597, %v1765
        %v1767 = vpop.f32.mrf.mxu0
        %v1768 = vadd.f32 %v1599, %v1767
        %1769 = vmatmul.bf16.gmra.mxu0 %v970
        %v1770 = vpop.f32.mrf.mxu0
        %v1771 = vadd.f32 %v1602, %v1770
        %v1772 = vpop.f32.mrf.mxu0
        %v1773 = vadd.f32 %v1604, %v1772
        %1774 = vmatmul.bf16.gmra.mxu0 %v974
        %v1775 = vpop.f32.mrf.mxu0
        %v1776 = vadd.f32 %v1607, %v1775
        %v1777 = vpop.f32.mrf.mxu0
        %v1778 = vadd.f32 %v1609, %v1777
        %1779 = vmatmul.bf16.gmra.mxu0 %v978
        %v1780 = vpop.f32.mrf.mxu0
        %v1781 = vadd.f32 %v1612, %v1780
        %v1782 = vpop.f32.mrf.mxu0
        %v1783 = vadd.f32 %v1614, %v1782
        %1784 = vmatmul.bf16.gmra.mxu0 %v982
        %v1785 = vpop.f32.mrf.mxu0
        %v1786 = vadd.f32 %v1617, %v1785
        %v1787 = vpop.f32.mrf.mxu0
        %v1788 = vadd.f32 %v1619, %v1787
        %1789 = vmatmul.bf16.gmra.mxu0 %v986
        %v1790 = vpop.f32.mrf.mxu0
        %v1791 = vadd.f32 %v1622, %v1790
        %v1792 = vpop.f32.mrf.mxu0
        %v1793 = vadd.f32 %v1624, %v1792
        %1794 = vmatmul.bf16.gmra.mxu0 %v990
        %v1795 = vpop.f32.mrf.mxu0
        %v1796 = vadd.f32 %v1627, %v1795
        %v1797 = vpop.f32.mrf.mxu0
        %v1798 = vadd.f32 %v1629, %v1797
        %1799 = vmatmul.bf16.gmra.mxu0 %v994
        %v1800 = vpop.f32.mrf.mxu0
        %v1801 = vadd.f32 %v1632, %v1800
        %v1802 = vpop.f32.mrf.mxu0
        %v1803 = vadd.f32 %v1634, %v1802
        %1804 = vmatmul.bf16.gmra.mxu0 %v998
        %v1805 = vpop.f32.mrf.mxu0
        %v1806 = vadd.f32 %v1637, %v1805
        %v1807 = vpop.f32.mrf.mxu0
        %v1808 = vadd.f32 %v1639, %v1807
        %1809 = vmatmul.bf16.gmra.mxu0 %v1002
        %v1810 = vpop.f32.mrf.mxu0
        %v1811 = vadd.f32 %v1642, %v1810
        %v1812 = vpop.f32.mrf.mxu0
        %v1813 = vadd.f32 %v1644, %v1812
        %1814 = vmatmul.bf16.gmra.mxu0 %v1006
        %v1815 = vpop.f32.mrf.mxu0
        %v1816 = vadd.f32 %v1647, %v1815
        %v1817 = vpop.f32.mrf.mxu0
        %v1818 = vadd.f32 %v1649, %v1817
        %1819 = vmatmul.bf16.gmra.mxu0 %v1010
        %v1820 = vpop.f32.mrf.mxu0
        %v1821 = vadd.f32 %v1652, %v1820
        %v1822 = vpop.f32.mrf.mxu0
        %v1823 = vadd.f32 %v1654, %v1822
        %1824 = vmatmul.bf16.gmra.mxu0 %v1014
        %v1825 = vpop.f32.mrf.mxu0
        %v1826 = vadd.f32 %v1657, %v1825
        %v1827 = vpop.f32.mrf.mxu0
        %v1828 = vadd.f32 %v1659, %v1827
        %1829 = vmatmul.bf16.gmra.mxu0 %v1018
        %v1830 = vpop.f32.mrf.mxu0
        %v1831 = vadd.f32 %v1662, %v1830
        %v1832 = vpop.f32.mrf.mxu0
        %v1833 = vadd.f32 %v1664, %v1832
        %1834 = vmatmul.bf16.gmra.mxu0 %v1022
        %v1835 = vpop.f32.mrf.mxu0
        %v1836 = vadd.f32 %v1667, %v1835
        %v1837 = vpop.f32.mrf.mxu0
        %v1838 = vadd.f32 %v1669, %v1837
        %1839 = vmatmul.bf16.gmra.mxu0 %v1026
        %v1840 = vpop.f32.mrf.mxu0
        %v1841 = vadd.f32 %v1672, %v1840
        %v1842 = vpop.f32.mrf.mxu0
        %v1843 = vadd.f32 %v1674, %v1842
        %1844 = vmatmul.bf16.gmra.mxu0 %v1030
        %v1845 = vpop.f32.mrf.mxu0
        %v1846 = vadd.f32 %v1677, %v1845
        %v1847 = vpop.f32.mrf.mxu0
        %v1848 = vadd.f32 %v1679, %v1847
        %1849 = vmatmul.bf16.gmra.mxu0 %v1034
        %v1850 = vpop.f32.mrf.mxu0
        %v1851 = vadd.f32 %v1682, %v1850
        %v1852 = vpop.f32.mrf.mxu0
        %v1853 = vadd.f32 %v1684, %v1852
        %1854 = vmatmul.bf16.gmra.mxu0 %v1038
        %v1855 = vpop.f32.mrf.mxu0
        %v1856 = vadd.f32 %v1687, %v1855
        %v1857 = vpop.f32.mrf.mxu0
        %v1858 = vadd.f32 %v1689, %v1857
        %1859 = vmatmul.bf16.gmra.mxu0 %v1042
        %v1860 = vpop.f32.mrf.mxu0
        %v1861 = vadd.f32 %v1692, %v1860
        %v1862 = vpop.f32.mrf.mxu0
        %v1863 = vadd.f32 %v1694, %v1862
        %1864 = vmatmul.bf16.gmra.mxu0 %v1046
        %v1865 = vpop.f32.mrf.mxu0
        %v1866 = vadd.f32 %v1697, %v1865
        %v1867 = vpop.f32.mrf.mxu0
        %v1868 = vadd.f32 %v1699, %v1867
        %1869 = vmatmul.bf16.gmra.mxu0 %v1050
        %v1870 = vpop.f32.mrf.mxu0
        %v1871 = vadd.f32 %v1702, %v1870
        %v1872 = vpop.f32.mrf.mxu0
        %v1873 = vadd.f32 %v1704, %v1872
        %1874 = vmatmul.bf16.gmra.mxu0 %v1054
        %v1875 = vpop.f32.mrf.mxu0
        %v1876 = vadd.f32 %v1707, %v1875
        %v1877 = vpop.f32.mrf.mxu0
        %v1878 = vadd.f32 %v1709, %v1877
        %1879 = vmatmul.bf16.gmra.mxu0 %v1058
        %v1880 = vpop.f32.mrf.mxu0
        %v1881 = vadd.f32 %v1712, %v1880
        %v1882 = vpop.f32.mrf.mxu0
        %v1883 = vadd.f32 %v1714, %v1882
        %1884 = vmatmul.bf16.gmra.mxu0 %v1062
        %v1885 = vpop.f32.mrf.mxu0
        %v1886 = vadd.f32 %v1717, %v1885
        %v1887 = vpop.f32.mrf.mxu0
        %v1888 = vadd.f32 %v1719, %v1887
        %1889 = vmatmul.bf16.gmra.mxu0 %v1066
        %v1890 = vpop.f32.mrf.mxu0
        %v1891 = vadd.f32 %v1722, %v1890
        %v1892 = vpop.f32.mrf.mxu0
        %v1893 = vadd.f32 %v1724, %v1892
        %1894 = vdwg.mxu0
        %1895 = vmatpush.bf16.msra.mxu0 %v1355
        %1896 = vmatpush.bf16.msra.mxu0 %v1354
        %1897 = vmatpush.bf16.msra.mxu0 %v1353
        %1898 = vmatpush.bf16.msra.mxu0 %v1352
        %1899 = vmatpush.bf16.msra.mxu0 %v1351
        %1900 = vmatpush.bf16.msra.mxu0 %v1350
        %1901 = vmatpush.bf16.msra.mxu0 %v1349
        %1902 = vmatpush.bf16.msra.mxu0 %v1348
        %1903 = vmatmul.bf16.gmra.mxu0 %v943
        %v1904 = vpop.f32.mrf.mxu0
        %v1905 = vadd.f32 %v1736, %v1904
        %v1906 = vpop.f32.mrf.mxu0
        %v1907 = vadd.f32 %v1738, %v1906
        %1908 = vmatmul.bf16.gmra.mxu0 %v947
        %v1909 = vpop.f32.mrf.mxu0
        %v1910 = vadd.f32 %v1741, %v1909
        %v1911 = vpop.f32.mrf.mxu0
        %v1912 = vadd.f32 %v1743, %v1911
        %1913 = vmatmul.bf16.gmra.mxu0 %v951
        %v1914 = vpop.f32.mrf.mxu0
        %v1915 = vadd.f32 %v1746, %v1914
        %v1916 = vpop.f32.mrf.mxu0
        %v1917 = vadd.f32 %v1748, %v1916
        %1918 = vmatmul.bf16.gmra.mxu0 %v955
        %v1919 = vpop.f32.mrf.mxu0
        %v1920 = vadd.f32 %v1751, %v1919
        %v1921 = vpop.f32.mrf.mxu0
        %v1922 = vadd.f32 %v1753, %v1921
        %1923 = vmatmul.bf16.gmra.mxu0 %v959
        %v1924 = vpop.f32.mrf.mxu0
        %v1925 = vadd.f32 %v1756, %v1924
        %v1926 = vpop.f32.mrf.mxu0
        %v1927 = vadd.f32 %v1758, %v1926
        %1928 = vmatmul.bf16.gmra.mxu0 %v963
        %v1929 = vpop.f32.mrf.mxu0
        %v1930 = vadd.f32 %v1761, %v1929
        %v1931 = vpop.f32.mrf.mxu0
        %v1932 = vadd.f32 %v1763, %v1931
        %1933 = vmatmul.bf16.gmra.mxu0 %v967
        %v1934 = vpop.f32.mrf.mxu0
        %v1935 = vadd.f32 %v1766, %v1934
        %v1936 = vpop.f32.mrf.mxu0
        %v1937 = vadd.f32 %v1768, %v1936
        %1938 = vmatmul.bf16.gmra.mxu0 %v971
        %v1939 = vpop.f32.mrf.mxu0
        %v1940 = vadd.f32 %v1771, %v1939
        %v1941 = vpop.f32.mrf.mxu0
        %v1942 = vadd.f32 %v1773, %v1941
        %1943 = vmatmul.bf16.gmra.mxu0 %v975
        %v1944 = vpop.f32.mrf.mxu0
        %v1945 = vadd.f32 %v1776, %v1944
        %v1946 = vpop.f32.mrf.mxu0
        %v1947 = vadd.f32 %v1778, %v1946
        %1948 = vmatmul.bf16.gmra.mxu0 %v979
        %v1949 = vpop.f32.mrf.mxu0
        %v1950 = vadd.f32 %v1781, %v1949
        %v1951 = vpop.f32.mrf.mxu0
        %v1952 = vadd.f32 %v1783, %v1951
        %1953 = vmatmul.bf16.gmra.mxu0 %v983
        %v1954 = vpop.f32.mrf.mxu0
        %v1955 = vadd.f32 %v1786, %v1954
        %v1956 = vpop.f32.mrf.mxu0
        %v1957 = vadd.f32 %v1788, %v1956
        %1958 = vmatmul.bf16.gmra.mxu0 %v987
        %v1959 = vpop.f32.mrf.mxu0
        %v1960 = vadd.f32 %v1791, %v1959
        %v1961 = vpop.f32.mrf.mxu0
        %v1962 = vadd.f32 %v1793, %v1961
        %1963 = vmatmul.bf16.gmra.mxu0 %v991
        %v1964 = vpop.f32.mrf.mxu0
        %v1965 = vadd.f32 %v1796, %v1964
        %v1966 = vpop.f32.mrf.mxu0
        %v1967 = vadd.f32 %v1798, %v1966
        %1968 = vmatmul.bf16.gmra.mxu0 %v995
        %v1969 = vpop.f32.mrf.mxu0
        %v1970 = vadd.f32 %v1801, %v1969
        %v1971 = vpop.f32.mrf.mxu0
        %v1972 = vadd.f32 %v1803, %v1971
        %1973 = vmatmul.bf16.gmra.mxu0 %v999
        %v1974 = vpop.f32.mrf.mxu0
        %v1975 = vadd.f32 %v1806, %v1974
        %v1976 = vpop.f32.mrf.mxu0
        %v1977 = vadd.f32 %v1808, %v1976
        %1978 = vmatmul.bf16.gmra.mxu0 %v1003
        %v1979 = vpop.f32.mrf.mxu0
        %v1980 = vadd.f32 %v1811, %v1979
        %v1981 = vpop.f32.mrf.mxu0
        %v1982 = vadd.f32 %v1813, %v1981
        %1983 = vmatmul.bf16.gmra.mxu0 %v1007
        %v1984 = vpop.f32.mrf.mxu0
        %v1985 = vadd.f32 %v1816, %v1984
        %v1986 = vpop.f32.mrf.mxu0
        %v1987 = vadd.f32 %v1818, %v1986
        %1988 = vmatmul.bf16.gmra.mxu0 %v1011
        %v1989 = vpop.f32.mrf.mxu0
        %v1990 = vadd.f32 %v1821, %v1989
        %v1991 = vpop.f32.mrf.mxu0
        %v1992 = vadd.f32 %v1823, %v1991
        %1993 = vmatmul.bf16.gmra.mxu0 %v1015
        %v1994 = vpop.f32.mrf.mxu0
        %v1995 = vadd.f32 %v1826, %v1994
        %v1996 = vpop.f32.mrf.mxu0
        %v1997 = vadd.f32 %v1828, %v1996
        %1998 = vmatmul.bf16.gmra.mxu0 %v1019
        %v1999 = vpop.f32.mrf.mxu0
        %v2000 = vadd.f32 %v1831, %v1999
        %v2001 = vpop.f32.mrf.mxu0
        %v2002 = vadd.f32 %v1833, %v2001
        %2003 = vmatmul.bf16.gmra.mxu0 %v1023
        %v2004 = vpop.f32.mrf.mxu0
        %v2005 = vadd.f32 %v1836, %v2004
        %v2006 = vpop.f32.mrf.mxu0
        %v2007 = vadd.f32 %v1838, %v2006
        %2008 = vmatmul.bf16.gmra.mxu0 %v1027
        %v2009 = vpop.f32.mrf.mxu0
        %v2010 = vadd.f32 %v1841, %v2009
        %v2011 = vpop.f32.mrf.mxu0
        %v2012 = vadd.f32 %v1843, %v2011
        %2013 = vmatmul.bf16.gmra.mxu0 %v1031
        %v2014 = vpop.f32.mrf.mxu0
        %v2015 = vadd.f32 %v1846, %v2014
        %v2016 = vpop.f32.mrf.mxu0
        %v2017 = vadd.f32 %v1848, %v2016
        %2018 = vmatmul.bf16.gmra.mxu0 %v1035
        %v2019 = vpop.f32.mrf.mxu0
        %v2020 = vadd.f32 %v1851, %v2019
        %v2021 = vpop.f32.mrf.mxu0
        %v2022 = vadd.f32 %v1853, %v2021
        %2023 = vmatmul.bf16.gmra.mxu0 %v1039
        %v2024 = vpop.f32.mrf.mxu0
        %v2025 = vadd.f32 %v1856, %v2024
        %v2026 = vpop.f32.mrf.mxu0
        %v2027 = vadd.f32 %v1858, %v2026
        %2028 = vmatmul.bf16.gmra.mxu0 %v1043
        %v2029 = vpop.f32.mrf.mxu0
        %v2030 = vadd.f32 %v1861, %v2029
        %v2031 = vpop.f32.mrf.mxu0
        %v2032 = vadd.f32 %v1863, %v2031
        %2033 = vmatmul.bf16.gmra.mxu0 %v1047
        %v2034 = vpop.f32.mrf.mxu0
        %v2035 = vadd.f32 %v1866, %v2034
        %v2036 = vpop.f32.mrf.mxu0
        %v2037 = vadd.f32 %v1868, %v2036
        %2038 = vmatmul.bf16.gmra.mxu0 %v1051
        %v2039 = vpop.f32.mrf.mxu0
        %v2040 = vadd.f32 %v1871, %v2039
        %v2041 = vpop.f32.mrf.mxu0
        %v2042 = vadd.f32 %v1873, %v2041
        %2043 = vmatmul.bf16.gmra.mxu0 %v1055
        %v2044 = vpop.f32.mrf.mxu0
        %v2045 = vadd.f32 %v1876, %v2044
        %v2046 = vpop.f32.mrf.mxu0
        %v2047 = vadd.f32 %v1878, %v2046
        %2048 = vmatmul.bf16.gmra.mxu0 %v1059
        %v2049 = vpop.f32.mrf.mxu0
        %v2050 = vadd.f32 %v1881, %v2049
        %v2051 = vpop.f32.mrf.mxu0
        %v2052 = vadd.f32 %v1883, %v2051
        %2053 = vmatmul.bf16.gmra.mxu0 %v1063
        %v2054 = vpop.f32.mrf.mxu0
        %v2055 = vadd.f32 %v1886, %v2054
        %v2056 = vpop.f32.mrf.mxu0
        %v2057 = vadd.f32 %v1888, %v2056
        %2058 = vmatmul.bf16.gmra.mxu0 %v1067
        %v2059 = vpop.f32.mrf.mxu0
        %v2060 = vadd.f32 %v1891, %v2059
        %v2061 = vpop.f32.mrf.mxu0
        %v2062 = vadd.f32 %v1893, %v2061
        %2063 = vdwg.mxu0
        %v2064 = vadd.f32 %v300, %v1905
        %v2065 = vadd.f32 %v301, %v1907
        %v2066 = vadd.f32 %v302, %v1910
        %v2067 = vadd.f32 %v303, %v1912
        %v2068 = vadd.f32 %v304, %v1915
        %v2069 = vadd.f32 %v305, %v1917
        %v2070 = vadd.f32 %v306, %v1920
        %v2071 = vadd.f32 %v307, %v1922
        %v2072 = vadd.f32 %v308, %v1925
        %v2073 = vadd.f32 %v309, %v1927
        %v2074 = vadd.f32 %v310, %v1930
        %v2075 = vadd.f32 %v311, %v1932
        %v2076 = vadd.f32 %v312, %v1935
        %v2077 = vadd.f32 %v313, %v1937
        %v2078 = vadd.f32 %v314, %v1940
        %v2079 = vadd.f32 %v315, %v1942
        %v2080 = vadd.f32 %v316, %v1945
        %v2081 = vadd.f32 %v317, %v1947
        %v2082 = vadd.f32 %v318, %v1950
        %v2083 = vadd.f32 %v319, %v1952
        %v2084 = vadd.f32 %v320, %v1955
        %v2085 = vadd.f32 %v321, %v1957
        %v2086 = vadd.f32 %v322, %v1960
        %v2087 = vadd.f32 %v323, %v1962
        %v2088 = vadd.f32 %v324, %v1965
        %v2089 = vadd.f32 %v325, %v1967
        %v2090 = vadd.f32 %v326, %v1970
        %v2091 = vadd.f32 %v327, %v1972
        %v2092 = vadd.f32 %v328, %v1975
        %v2093 = vadd.f32 %v329, %v1977
        %v2094 = vadd.f32 %v330, %v1980
        %v2095 = vadd.f32 %v331, %v1982
        %v2096 = vadd.f32 %v332, %v1985
        %v2097 = vadd.f32 %v333, %v1987
        %v2098 = vadd.f32 %v334, %v1990
        %v2099 = vadd.f32 %v335, %v1992
        %v2100 = vadd.f32 %v336, %v1995
        %v2101 = vadd.f32 %v337, %v1997
        %v2102 = vadd.f32 %v338, %v2000
        %v2103 = vadd.f32 %v339, %v2002
        %v2104 = vadd.f32 %v340, %v2005
        %v2105 = vadd.f32 %v341, %v2007
        %v2106 = vadd.f32 %v342, %v2010
        %v2107 = vadd.f32 %v343, %v2012
        %v2108 = vadd.f32 %v344, %v2015
        %v2109 = vadd.f32 %v345, %v2017
        %v2110 = vadd.f32 %v346, %v2020
        %v2111 = vadd.f32 %v347, %v2022
        %v2112 = vadd.f32 %v348, %v2025
        %v2113 = vadd.f32 %v349, %v2027
        %v2114 = vadd.f32 %v350, %v2030
        %v2115 = vadd.f32 %v351, %v2032
        %v2116 = vadd.f32 %v352, %v2035
        %v2117 = vadd.f32 %v353, %v2037
        %v2118 = vadd.f32 %v354, %v2040
        %v2119 = vadd.f32 %v355, %v2042
        %v2120 = vadd.f32 %v356, %v2045
        %v2121 = vadd.f32 %v357, %v2047
        %v2122 = vadd.f32 %v358, %v2050
        %v2123 = vadd.f32 %v359, %v2052
        %v2124 = vadd.f32 %v360, %v2055
        %v2125 = vadd.f32 %v361, %v2057
        %v2126 = vadd.f32 %v362, %v2060
        %v2127 = vadd.f32 %v363, %v2062
        %2128 = vst [vmem:[#allocation2] sm:$0xff] %v2064
        %2129 = vst [vmem:[#allocation2 + $0x8] sm:$0xff] %v2065
        %2130 = vst [vmem:[#allocation2 + $0x10] sm:$0xff] %v2066
        %2131 = vst [vmem:[#allocation2 + $0x18] sm:$0xff] %v2067
        %2132 = vst [vmem:[#allocation2 + $0x20] sm:$0xff] %v2068
        %2133 = vst [vmem:[#allocation2 + $0x28] sm:$0xff] %v2069
        %2134 = vst [vmem:[#allocation2 + $0x30] sm:$0xff] %v2070
        %2135 = vst [vmem:[#allocation2 + $0x38] sm:$0xff] %v2071
        %2136 = vst [vmem:[#allocation2 + $0x40] sm:$0xff] %v2072
        %2137 = vst [vmem:[#allocation2 + $0x48] sm:$0xff] %v2073
        %2138 = vst [vmem:[#allocation2 + $0x50] sm:$0xff] %v2074
        %2139 = vst [vmem:[#allocation2 + $0x58] sm:$0xff] %v2075
        %2140 = vst [vmem:[#allocation2 + $0x60] sm:$0xff] %v2076
        %2141 = vst [vmem:[#allocation2 + $0x68] sm:$0xff] %v2077
        %2142 = vst [vmem:[#allocation2 + $0x70] sm:$0xff] %v2078
        %2143 = vst [vmem:[#allocation2 + $0x78] sm:$0xff] %v2079
        %2144 = vst [vmem:[#allocation2 + $0x80] sm:$0xff] %v2080
        %2145 = vst [vmem:[#allocation2 + $0x88] sm:$0xff] %v2081
        %2146 = vst [vmem:[#allocation2 + $0x90] sm:$0xff] %v2082
        %2147 = vst [vmem:[#allocation2 + $0x98] sm:$0xff] %v2083
        %2148 = vst [vmem:[#allocation2 + $0xa0] sm:$0xff] %v2084
        %2149 = vst [vmem:[#allocation2 + $0xa8] sm:$0xff] %v2085
        %2150 = vst [vmem:[#allocation2 + $0xb0] sm:$0xff] %v2086
        %2151 = vst [vmem:[#allocation2 + $0xb8] sm:$0xff] %v2087
        %2152 = vst [vmem:[#allocation2 + $0xc0] sm:$0xff] %v2088
        %2153 = vst [vmem:[#allocation2 + $0xc8] sm:$0xff] %v2089
        %2154 = vst [vmem:[#allocation2 + $0xd0] sm:$0xff] %v2090
        %2155 = vst [vmem:[#allocation2 + $0xd8] sm:$0xff] %v2091
        %2156 = vst [vmem:[#allocation2 + $0xe0] sm:$0xff] %v2092
        %2157 = vst [vmem:[#allocation2 + $0xe8] sm:$0xff] %v2093
        %2158 = vst [vmem:[#allocation2 + $0xf0] sm:$0xff] %v2094
        %2159 = vst [vmem:[#allocation2 + $0xf8] sm:$0xff] %v2095
        %2160 = vst [vmem:[#allocation2 + $0x100] sm:$0xff] %v2096
        %2161 = vst [vmem:[#allocation2 + $0x108] sm:$0xff] %v2097
        %2162 = vst [vmem:[#allocation2 + $0x110] sm:$0xff] %v2098
        %2163 = vst [vmem:[#allocation2 + $0x118] sm:$0xff] %v2099
        %2164 = vst [vmem:[#allocation2 + $0x120] sm:$0xff] %v2100
        %2165 = vst [vmem:[#allocation2 + $0x128] sm:$0xff] %v2101
        %2166 = vst [vmem:[#allocation2 + $0x130] sm:$0xff] %v2102
        %2167 = vst [vmem:[#allocation2 + $0x138] sm:$0xff] %v2103
        %2168 = vst [vmem:[#allocation2 + $0x140] sm:$0xff] %v2104
        %2169 = vst [vmem:[#allocation2 + $0x148] sm:$0xff] %v2105
        %2170 = vst [vmem:[#allocation2 + $0x150] sm:$0xff] %v2106
        %2171 = vst [vmem:[#allocation2 + $0x158] sm:$0xff] %v2107
        %2172 = vst [vmem:[#allocation2 + $0x160] sm:$0xff] %v2108
        %2173 = vst [vmem:[#allocation2 + $0x168] sm:$0xff] %v2109
        %2174 = vst [vmem:[#allocation2 + $0x170] sm:$0xff] %v2110
        %2175 = vst [vmem:[#allocation2 + $0x178] sm:$0xff] %v2111
        %2176 = vst [vmem:[#allocation2 + $0x180] sm:$0xff] %v2112
        %2177 = vst [vmem:[#allocation2 + $0x188] sm:$0xff] %v2113
        %2178 = vst [vmem:[#allocation2 + $0x190] sm:$0xff] %v2114
        %2179 = vst [vmem:[#allocation2 + $0x198] sm:$0xff] %v2115
        %2180 = vst [vmem:[#allocation2 + $0x1a0] sm:$0xff] %v2116
        %2181 = vst [vmem:[#allocation2 + $0x1a8] sm:$0xff] %v2117
        %2182 = vst [vmem:[#allocation2 + $0x1b0] sm:$0xff] %v2118
        %2183 = vst [vmem:[#allocation2 + $0x1b8] sm:$0xff] %v2119
        %2184 = vst [vmem:[#allocation2 + $0x1c0] sm:$0xff] %v2120
        %2185 = vst [vmem:[#allocation2 + $0x1c8] sm:$0xff] %v2121
        %2186 = vst [vmem:[#allocation2 + $0x1d0] sm:$0xff] %v2122
        %2187 = vst [vmem:[#allocation2 + $0x1d8] sm:$0xff] %v2123
        %2188 = vst [vmem:[#allocation2 + $0x1e0] sm:$0xff] %v2124
        %2189 = vst [vmem:[#allocation2 + $0x1e8] sm:$0xff] %v2125
        %2190 = vst [vmem:[#allocation2 + $0x1f0] sm:$0xff] %v2126
        %2191 = vst [vmem:[#allocation2 + $0x1f8] sm:$0xff] %v2127
        %p2192 = scmp.eq.s32.totalorder %s27, 1
        // Predicated region
        $region41: #{tpu_custom_call.1} parent=27 // pred_check
          %p2193 = pneg %p2192
        $region42: #{tpu_custom_call.1} parent=27 // pred_check_branch
          %2195 = sbr.rel (%p2193) target = $region44
        $region43: #{tpu_custom_call.1} parent=27 // pred_region
          %v2196 = vld [vmem:[#allocation2] sm:$0xff]
          %v2197 = vld [vmem:[#allocation2 + $0x8] sm:$0xff]
          %v2198 = vld [vmem:[#allocation2 + $0x10] sm:$0xff]
          %v2199 = vld [vmem:[#allocation2 + $0x18] sm:$0xff]
          %v2200 = vld [vmem:[#allocation2 + $0x20] sm:$0xff]
          %v2201 = vld [vmem:[#allocation2 + $0x28] sm:$0xff]
          %v2202 = vld [vmem:[#allocation2 + $0x30] sm:$0xff]
          %v2203 = vld [vmem:[#allocation2 + $0x38] sm:$0xff]
          %v2204 = vld [vmem:[#allocation2 + $0x40] sm:$0xff]
          %v2205 = vld [vmem:[#allocation2 + $0x48] sm:$0xff]
          %v2206 = vld [vmem:[#allocation2 + $0x50] sm:$0xff]
          %v2207 = vld [vmem:[#allocation2 + $0x58] sm:$0xff]
          %v2208 = vld [vmem:[#allocation2 + $0x60] sm:$0xff]
          %v2209 = vld [vmem:[#allocation2 + $0x68] sm:$0xff]
          %v2210 = vld [vmem:[#allocation2 + $0x70] sm:$0xff]
          %v2211 = vld [vmem:[#allocation2 + $0x78] sm:$0xff]
          %v2212 = vld [vmem:[#allocation2 + $0x80] sm:$0xff]
          %v2213 = vld [vmem:[#allocation2 + $0x88] sm:$0xff]
          %v2214 = vld [vmem:[#allocation2 + $0x90] sm:$0xff]
          %v2215 = vld [vmem:[#allocation2 + $0x98] sm:$0xff]
          %v2216 = vld [vmem:[#allocation2 + $0xa0] sm:$0xff]
          %v2217 = vld [vmem:[#allocation2 + $0xa8] sm:$0xff]
          %v2218 = vld [vmem:[#allocation2 + $0xb0] sm:$0xff]
          %v2219 = vld [vmem:[#allocation2 + $0xb8] sm:$0xff]
          %v2220 = vld [vmem:[#allocation2 + $0xc0] sm:$0xff]
          %v2221 = vld [vmem:[#allocation2 + $0xc8] sm:$0xff]
          %v2222 = vld [vmem:[#allocation2 + $0xd0] sm:$0xff]
          %v2223 = vld [vmem:[#allocation2 + $0xd8] sm:$0xff]
          %v2224 = vld [vmem:[#allocation2 + $0xe0] sm:$0xff]
          %v2225 = vld [vmem:[#allocation2 + $0xe8] sm:$0xff]
          %v2226 = vld [vmem:[#allocation2 + $0xf0] sm:$0xff]
          %v2227 = vld [vmem:[#allocation2 + $0xf8] sm:$0xff]
          %v2228 = vld [vmem:[#allocation2 + $0x100] sm:$0xff]
          %v2229 = vld [vmem:[#allocation2 + $0x108] sm:$0xff]
          %v2230 = vld [vmem:[#allocation2 + $0x110] sm:$0xff]
          %v2231 = vld [vmem:[#allocation2 + $0x118] sm:$0xff]
          %v2232 = vld [vmem:[#allocation2 + $0x120] sm:$0xff]
          %v2233 = vld [vmem:[#allocation2 + $0x128] sm:$0xff]
          %v2234 = vld [vmem:[#allocation2 + $0x130] sm:$0xff]
          %v2235 = vld [vmem:[#allocation2 + $0x138] sm:$0xff]
          %v2236 = vld [vmem:[#allocation2 + $0x140] sm:$0xff]
          %v2237 = vld [vmem:[#allocation2 + $0x148] sm:$0xff]
          %v2238 = vld [vmem:[#allocation2 + $0x150] sm:$0xff]
          %v2239 = vld [vmem:[#allocation2 + $0x158] sm:$0xff]
          %v2240 = vld [vmem:[#allocation2 + $0x160] sm:$0xff]
          %v2241 = vld [vmem:[#allocation2 + $0x168] sm:$0xff]
          %v2242 = vld [vmem:[#allocation2 + $0x170] sm:$0xff]
          %v2243 = vld [vmem:[#allocation2 + $0x178] sm:$0xff]
          %v2244 = vld [vmem:[#allocation2 + $0x180] sm:$0xff]
          %v2245 = vld [vmem:[#allocation2 + $0x188] sm:$0xff]
          %v2246 = vld [vmem:[#allocation2 + $0x190] sm:$0xff]
          %v2247 = vld [vmem:[#allocation2 + $0x198] sm:$0xff]
          %v2248 = vld [vmem:[#allocation2 + $0x1a0] sm:$0xff]
          %v2249 = vld [vmem:[#allocation2 + $0x1a8] sm:$0xff]
          %v2250 = vld [vmem:[#allocation2 + $0x1b0] sm:$0xff]
          %v2251 = vld [vmem:[#allocation2 + $0x1b8] sm:$0xff]
          %v2252 = vld [vmem:[#allocation2 + $0x1c0] sm:$0xff]
          %v2253 = vld [vmem:[#allocation2 + $0x1c8] sm:$0xff]
          %v2254 = vld [vmem:[#allocation2 + $0x1d0] sm:$0xff]
          %v2255 = vld [vmem:[#allocation2 + $0x1d8] sm:$0xff]
          %v2256 = vld [vmem:[#allocation2 + $0x1e0] sm:$0xff]
          %v2257 = vld [vmem:[#allocation2 + $0x1e8] sm:$0xff]
          %v2258 = vld [vmem:[#allocation2 + $0x1f0] sm:$0xff]
          %v2259 = vld [vmem:[#allocation2 + $0x1f8] sm:$0xff]
          %2260 = vst [vmem:[#allocation8] sm:$0xff] %v2196
          %2261 = vst [vmem:[#allocation8 + $0x8] sm:$0xff] %v2197
          %2262 = vst [vmem:[#allocation8 + $0x10] sm:$0xff] %v2198
          %2263 = vst [vmem:[#allocation8 + $0x18] sm:$0xff] %v2199
          %2264 = vst [vmem:[#allocation8 + $0x20] sm:$0xff] %v2200
          %2265 = vst [vmem:[#allocation8 + $0x28] sm:$0xff] %v2201
          %2266 = vst [vmem:[#allocation8 + $0x30] sm:$0xff] %v2202
          %2267 = vst [vmem:[#allocation8 + $0x38] sm:$0xff] %v2203
          %2268 = vst [vmem:[#allocation8 + $0x40] sm:$0xff] %v2204
          %2269 = vst [vmem:[#allocation8 + $0x48] sm:$0xff] %v2205
          %2270 = vst [vmem:[#allocation8 + $0x50] sm:$0xff] %v2206
          %2271 = vst [vmem:[#allocation8 + $0x58] sm:$0xff] %v2207
          %2272 = vst [vmem:[#allocation8 + $0x60] sm:$0xff] %v2208
          %2273 = vst [vmem:[#allocation8 + $0x68] sm:$0xff] %v2209
          %2274 = vst [vmem:[#allocation8 + $0x70] sm:$0xff] %v2210
          %2275 = vst [vmem:[#allocation8 + $0x78] sm:$0xff] %v2211
          %2276 = vst [vmem:[#allocation8 + $0x80] sm:$0xff] %v2212
          %2277 = vst [vmem:[#allocation8 + $0x88] sm:$0xff] %v2213
          %2278 = vst [vmem:[#allocation8 + $0x90] sm:$0xff] %v2214
          %2279 = vst [vmem:[#allocation8 + $0x98] sm:$0xff] %v2215
          %2280 = vst [vmem:[#allocation8 + $0xa0] sm:$0xff] %v2216
          %2281 = vst [vmem:[#allocation8 + $0xa8] sm:$0xff] %v2217
          %2282 = vst [vmem:[#allocation8 + $0xb0] sm:$0xff] %v2218
          %2283 = vst [vmem:[#allocation8 + $0xb8] sm:$0xff] %v2219
          %2284 = vst [vmem:[#allocation8 + $0xc0] sm:$0xff] %v2220
          %2285 = vst [vmem:[#allocation8 + $0xc8] sm:$0xff] %v2221
          %2286 = vst [vmem:[#allocation8 + $0xd0] sm:$0xff] %v2222
          %2287 = vst [vmem:[#allocation8 + $0xd8] sm:$0xff] %v2223
          %2288 = vst [vmem:[#allocation8 + $0xe0] sm:$0xff] %v2224
          %2289 = vst [vmem:[#allocation8 + $0xe8] sm:$0xff] %v2225
          %2290 = vst [vmem:[#allocation8 + $0xf0] sm:$0xff] %v2226
          %2291 = vst [vmem:[#allocation8 + $0xf8] sm:$0xff] %v2227
          %2292 = vst [vmem:[#allocation8 + $0x100] sm:$0xff] %v2228
          %2293 = vst [vmem:[#allocation8 + $0x108] sm:$0xff] %v2229
          %2294 = vst [vmem:[#allocation8 + $0x110] sm:$0xff] %v2230
          %2295 = vst [vmem:[#allocation8 + $0x118] sm:$0xff] %v2231
          %2296 = vst [vmem:[#allocation8 + $0x120] sm:$0xff] %v2232
          %2297 = vst [vmem:[#allocation8 + $0x128] sm:$0xff] %v2233
          %2298 = vst [vmem:[#allocation8 + $0x130] sm:$0xff] %v2234
          %2299 = vst [vmem:[#allocation8 + $0x138] sm:$0xff] %v2235
          %2300 = vst [vmem:[#allocation8 + $0x140] sm:$0xff] %v2236
          %2301 = vst [vmem:[#allocation8 + $0x148] sm:$0xff] %v2237
          %2302 = vst [vmem:[#allocation8 + $0x150] sm:$0xff] %v2238
          %2303 = vst [vmem:[#allocation8 + $0x158] sm:$0xff] %v2239
          %2304 = vst [vmem:[#allocation8 + $0x160] sm:$0xff] %v2240
          %2305 = vst [vmem:[#allocation8 + $0x168] sm:$0xff] %v2241
          %2306 = vst [vmem:[#allocation8 + $0x170] sm:$0xff] %v2242
          %2307 = vst [vmem:[#allocation8 + $0x178] sm:$0xff] %v2243
          %2308 = vst [vmem:[#allocation8 + $0x180] sm:$0xff] %v2244
          %2309 = vst [vmem:[#allocation8 + $0x188] sm:$0xff] %v2245
          %2310 = vst [vmem:[#allocation8 + $0x190] sm:$0xff] %v2246
          %2311 = vst [vmem:[#allocation8 + $0x198] sm:$0xff] %v2247
          %2312 = vst [vmem:[#allocation8 + $0x1a0] sm:$0xff] %v2248
          %2313 = vst [vmem:[#allocation8 + $0x1a8] sm:$0xff] %v2249
          %2314 = vst [vmem:[#allocation8 + $0x1b0] sm:$0xff] %v2250
          %2315 = vst [vmem:[#allocation8 + $0x1b8] sm:$0xff] %v2251
          %2316 = vst [vmem:[#allocation8 + $0x1c0] sm:$0xff] %v2252
          %2317 = vst [vmem:[#allocation8 + $0x1c8] sm:$0xff] %v2253
          %2318 = vst [vmem:[#allocation8 + $0x1d0] sm:$0xff] %v2254
          %2319 = vst [vmem:[#allocation8 + $0x1d8] sm:$0xff] %v2255
          %2320 = vst [vmem:[#allocation8 + $0x1e0] sm:$0xff] %v2256
          %2321 = vst [vmem:[#allocation8 + $0x1e8] sm:$0xff] %v2257
          %2322 = vst [vmem:[#allocation8 + $0x1f0] sm:$0xff] %v2258
          %2323 = vst [vmem:[#allocation8 + $0x1f8] sm:$0xff] %v2259
        $region44: #{tpu_custom_call.1} parent=27 // pred_fallthru
          _
        // Predicated region
        $region45: #{tpu_custom_call.1} parent=27 // pred_check
          %p2324 = pneg %p115
        $region46: #{tpu_custom_call.1} parent=27 // pred_check_branch
          %2326 = sbr.rel (%p2324) target = $region48
        $region47: #{tpu_custom_call.1} parent=27 // pred_region
          %s2327 = smul.u32 64, %s25
          %2329 = vsyncadd [#allocation5], 0
          %s2330 = sadd.s32 %s26, %s2327
          %s2331 = smul.addr %s2330, 8
          %s2332 = scalar_lea.hbm %s2, %s2331
          %s2333 = sshll.u32 [#allocation8], 4
          %s2334 = int_to_ptr.vmem [resolvable:$true] %s2333
          %s2335 = sshll.u32 %s2332, 4
          %s2336 = int_to_ptr.hbm [resolvable:$true] %s2335
          %2341 = dma.vmem_to_hbm [thread:$0]  %s2334, 8192, %s2336, [#allocation5], 128, 128, 8
        $region48: #{tpu_custom_call.1} parent=27 // pred_fallthru
          _
        // Predicated region
        $region49: #{tpu_custom_call.1} parent=27 // pred_check
          %p2342 = pneg %p115
        $region50: #{tpu_custom_call.1} parent=27 // pred_check_branch
          %2344 = sbr.rel (%p2342) target = $region52
        $region51: #{tpu_custom_call.1} parent=27 // pred_region
          %2346 = dma.done [#allocation5], 8192
        $region52: #{tpu_custom_call.1} parent=27 // pred_fallthru
          _
      $region28: #{tpu_custom_call.1} parent=5 // pred_fallthru
        _
      %p2347 = scmp.le.s32.totalorder 2, %s15
      // Predicated region
      $region53: #{tpu_custom_call.1} parent=5 // pred_check
        %p2348 = pneg %p2347
      $region54: #{tpu_custom_call.1} parent=5 // pred_check_branch
        %2350 = sbr.rel (%p2348) target = $region56
      $region55: #{tpu_custom_call.1} parent=5 // pred_region
        %s2351 = ssub.s32 %s15, 2
      $region56: #{tpu_custom_call.1} parent=5 // pred_fallthru
        _
    $region6: #{tpu_custom_call.1} parent=1 // loop_footer
      %s19 = sadd.s32 1, %s15
    $region7: #{tpu_custom_call.1} parent=1 // loop_footer_branch
      %14 = sbr.rel target = $region3
    $region8: #{tpu_custom_call.1} parent=1 // loop_exit
      _
    %2352 = vsyncpa [#allocation4], 1
    %s2353 = scalar_lea.sflag [#allocation4], 1
    %2354 = vsyncpa %s2353, 1
    %2355 = vsyncpa [#allocation7], 1
    %s2356 = scalar_lea.sflag [#allocation7], 1
    %2357 = vsyncpa %s2356, 1
    %2358 = vsyncpa [#allocation5], 1
    %s2359 = scalar_lea.sflag [#allocation5], 1
    %2360 = vsyncpa %s2359, 1

</llo_original>
